<compile_context>
chip_gen: v7x
topology: tpu7x:2x2x1
jax: 0.10.0
libtpu: 0.0.40
codegen_flags: <defaults>
</compile_context>

<pallas_src>
import jax
import jax.numpy as jnp
from jax.experimental import pallas as pl
from jax.experimental.pallas import tpu as pltpu

IN_OUT_DIM = 4                      # z is 2-D toy data; cat with repeated time -> 4 features
H1, H2, H3 = 100, 150, 100
OUT_DIM = IN_OUT_DIM // 2
# Lane-aligned (multiple-of-128) padded widths for the hidden layers / W4 columns.
H1P, H2P, H3P, OUTP = 128, 256, 128, 128


def _elu(x):
    # ELU with alpha=1; clamp the exp argument so the dead branch never produces inf.
    # (exp(x)-1 rather than expm1: guaranteed Mosaic lowering; abs error near 0 ~1e-8.)
    return jnp.where(x > 0, x, jnp.exp(jnp.minimum(x, 0.0)) - 1.0)


def cnf_kernel(z_ref, t_ref, w1b1_ref, w2_ref, w3_ref, w4_ref, b_ref, out_ref):
    z = z_ref[...]            # (TB, 2)   f32
    t = t_ref[...]            # (TB, 1)   f32
    w1b1 = w1b1_ref[...]      # (4, H1P)  f32: rows = W1[z0], W1[z1], W1[t]+W1[t], b1
    b = b_ref[...]            # (3, H2P)  f32: rows = b2, b3 (padded), b4 (padded)

    # Layer 1 with the cat([z, t, t]) concat folded in: pure VPU broadcast FMAs,
    # full 128-lane width (padded lanes stay exactly 0 and elu(0) = 0).
    h = (z[:, 0:1] * w1b1[0:1, :] + z[:, 1:2] * w1b1[1:2, :]
         + t * w1b1[2:3, :] + w1b1[3:4, :])                     # (TB, H1P) f32
    h = _elu(h)

    # Layers 2-3: bf16 operands on the MXU, f32 accumulation, f32 bias/ELU.
    h = jnp.dot(h.astype(jnp.bfloat16), w2_ref[...],
                preferred_element_type=jnp.float32) + b[0:1, :]
    h = _elu(h)
    h = jnp.dot(h.astype(jnp.bfloat16), w3_ref[...],
                preferred_element_type=jnp.float32) + b[1:2, :H3P]
    h = _elu(h)

    # Layer 4 in full f32 (output feeds an ODE integrator); slice to the 2 real
    # columns before the (tiny, masked) lane-sparse store.
    h = jnp.dot(h, w4_ref[...], preferred_element_type=jnp.float32)
    out_ref[...] = (h[:, :OUT_DIM] + b[2:3, :OUT_DIM]).astype(out_ref.dtype)


def _resident(shape):
    # Weight / bias blocks: full array, constant index_map -> resident across batch tiles.
    return pl.BlockSpec(shape, lambda i: (0,) * len(shape))


def _choose_tb(B):
    """Batch tile heuristic: amortize the ~0.35us/step grid overhead with big tiles,
    but keep >= 2 grid steps when B is large so the parallel batch axis can be
    sharded across both v7x TensorCores. VMEM stays < 2 MiB even at tb=1024."""
    if B >= 2048:
        return 1024
    if B >= 512:
        return ((B + 15) // 16) * 8          # ~ceil(B/2), rounded up to a sublane multiple
    return ((B + 7) // 8) * 8                # small batch: one tile


@jax.jit
def cnf_forward(time, z, params):
    """time: (B, 1) f32, z: (B, IN_OUT_DIM-2) f32 -> (B, OUT_DIM) f32."""
    w1b1, w2, w3, w4, bstack = params
    B = z.shape[0]
    tb = _choose_tb(B)
    Bp = ((B + tb - 1) // tb) * tb
    if Bp != B:                  # pad batch to a tile multiple (zeros), slice at the end
        z = jnp.pad(z, ((0, Bp - B), (0, 0)))
        time = jnp.pad(time, ((0, Bp - B), (0, 0)))

    weight_bytes = int(w1b1.size * 4 + w2.size * 2 + w3.size * 2
                       + w4.size * 4 + bstack.size * 4)
    cost = pl.CostEstimate(
        flops=2 * Bp * (H1P * H2P + H2P * H3P + H3P * OUTP) + 8 * Bp * H1P,
        transcendentals=Bp * (H1P + H2P + H3P),
        bytes_accessed=Bp * (2 + 1 + OUT_DIM) * 4 + weight_bytes,
    )

    out = pl.pallas_call(
        cnf_kernel,
        out_shape=jax.ShapeDtypeStruct((Bp, OUT_DIM), jnp.float32),
        grid_spec=pltpu.PrefetchScalarGridSpec(
            num_scalar_prefetch=0,
            grid=(Bp // tb,),
            in_specs=[
                pl.BlockSpec((tb, 2), lambda i: (i, 0)),     # z (both columns, one DMA)
                pl.BlockSpec((tb, 1), lambda i: (i, 0)),     # time
                _resident(w1b1.shape),                       # layer-1 rows + bias, stacked
                _resident(w2.shape),
                _resident(w3.shape),
                _resident(w4.shape),
                _resident(bstack.shape),                     # b2/b3/b4, stacked
            ],
            out_specs=pl.BlockSpec((tb, OUT_DIM), lambda i: (i, 0)),
        ),
        compiler_params=pltpu.CompilerParams(
            dimension_semantics=("parallel",)),
        cost_estimate=cost,
    )(z, time, w1b1, w2, w3, w4, bstack)

    return out if Bp == B else out[:B]


def init_raw_params(key):
    """PyTorch nn.Linear-style init (uniform +/- 1/sqrt(fan_in)); weights stored (in, out)."""
    dims = [(IN_OUT_DIM, H1), (H1, H2), (H2, H3), (H3, OUT_DIM)]
    raw = []
    for fin, fout in dims:
        key, kw, kb = jax.random.split(key, 3)
        bound = 1.0 / float(fin) ** 0.5
        w = jax.random.uniform(kw, (fin, fout), jnp.float32, -bound, bound)
        b = jax.random.uniform(kb, (fout,), jnp.float32, -bound, bound)
        raw.append((w, b))
    return raw


def pack_params(raw):
    """Fold the repeated-time rows of W1, stack small params, zero-pad everything to
    lane-aligned widths, cast the layer-2/3 MXU weights to bf16 (layer 4 stays f32)."""
    (w1, b1), (w2, b2), (w3, b3), (w4, b4) = raw

    def pad_vec(v, n):
        return jnp.pad(v, (0, n - v.shape[0]))

    def pad_2d(w, rows, cols):
        return jnp.pad(w, ((0, rows - w.shape[0]), (0, cols - w.shape[1])))

    w1b1 = jnp.stack([
        pad_vec(w1[0], H1P),            # row multiplying z[:, 0]
        pad_vec(w1[1], H1P),            # row multiplying z[:, 1]
        pad_vec(w1[2] + w1[3], H1P),    # folded repeated-time rows
        pad_vec(b1, H1P),               # bias b1
    ], axis=0)                          # (4, H1P) f32

    w2p = pad_2d(w2, H1P, H2P).astype(jnp.bfloat16)    # (128, 256) bf16
    w3p = pad_2d(w3, H2P, H3P).astype(jnp.bfloat16)    # (256, 128) bf16
    w4p = pad_2d(w4, H3P, OUTP)                        # (128, 128) f32

    bstack = jnp.stack([
        pad_vec(b2, H2P),
        pad_vec(b3, H2P),
        pad_vec(b4, H2P),
    ], axis=0)                          # (3, H2P) f32

    return (w1b1, w2p, w3p, w4p, bstack)


def cnf_reference_packed(time, z, packed):
    """Bit-for-bit emulation of the kernel math (bf16 L2/L3 operands, f32 accumulate)."""
    w1b1, w2, w3, w4, bst = packed
    h = (z[:, 0:1] * w1b1[0:1, :] + z[:, 1:2] * w1b1[1:2, :]
         + time * w1b1[2:3, :] + w1b1[3:4, :])
    h = _elu(h)
    h = jnp.dot(h.astype(jnp.bfloat16), w2, preferred_element_type=jnp.float32) + bst[0:1, :]
    h = _elu(h)
    h = jnp.dot(h.astype(jnp.bfloat16), w3, preferred_element_type=jnp.float32) + bst[1:2, :H3P]
    h = _elu(h)
    h = jnp.dot(h, w4, preferred_element_type=jnp.float32)
    return h[:, :OUT_DIM] + bst[2:3, :OUT_DIM]


def cnf_reference_f32(time, z, raw):
    """Exact f32 reference of the original PyTorch forward."""
    (w1, b1), (w2, b2), (w3, b3), (w4, b4) = raw
    x = jnp.concatenate([z, time, time], axis=1)
    h = _elu(x @ w1 + b1[None, :])
    h = _elu(h @ w2 + b2[None, :])
    h = _elu(h @ w3 + b3[None, :])
    return h @ w4 + b4[None, :]


if __name__ == "__main__":
    key = jax.random.PRNGKey(0)
    kp, kz, kt = jax.random.split(key, 3)

    raw = init_raw_params(kp)
    params = pack_params(raw)

    B = 203                                           # small; non-tile batch exercises padding
    z = jax.random.normal(kz, (B, IN_OUT_DIM - 2), jnp.float32)     # 2D toy-data states
    time = jax.random.uniform(kt, (B, 1), jnp.float32)              # integration time

    out = cnf_forward(time, z, params)
    out = jax.block_until_ready(out)
    assert out.shape == (B, OUT_DIM)

    # Primary check: identical math (bf16 MXU operands in L2/L3, f32 accumulation, f32 L4).
    ref_packed = cnf_reference_packed(time, z, params)
    assert jnp.allclose(out, ref_packed, atol=1e-3, rtol=1e-3), "mismatch vs packed reference"

    # Semantics check against the exact f32 PyTorch-equivalent forward (bf16 rounding slack).
    ref_f32 = cnf_reference_f32(time, z, raw)
    assert jnp.allclose(out, ref_f32, atol=7e-2, rtol=7e-2), "mismatch vs f32 reference"

    print("KERNEL_OK")
</pallas_src>

<mosaic_0001>
module attributes {stable_mosaic.version = 11 : i64} {
  func.func @cnf_kernel(%arg0: i32, %arg1: memref<208x2xf32, #tpu.memory_space<vmem>>, %arg2: memref<208x1xf32, #tpu.memory_space<vmem>>, %arg3: memref<4x128xf32, #tpu.memory_space<vmem>>, %arg4: memref<128x256xbf16, #tpu.memory_space<vmem>>, %arg5: memref<256x128xbf16, #tpu.memory_space<vmem>>, %arg6: memref<128x128xf32, #tpu.memory_space<vmem>>, %arg7: memref<3x256xf32, #tpu.memory_space<vmem>>, %arg8: memref<208x2xf32, #tpu.memory_space<vmem>>) attributes {dimension_semantics = [#tpu.dimension_semantics<parallel>], iteration_bounds = array<i64: 1>, scalar_prefetch = 0 : i64, scratch_operands = 0 : i64, tpu.core_type = #tpu.core_type<tc>, window_params = [{transform_indices = @transform_0, window_bounds = array<i64: 208, 2>}, {transform_indices = @transform_1, window_bounds = array<i64: 208, 1>}, {pipeline_mode = #tpu.pipeline_mode<synchronous>, transform_indices = @transform_2, window_bounds = array<i64: 4, 128>}, {pipeline_mode = #tpu.pipeline_mode<synchronous>, transform_indices = @transform_3, window_bounds = array<i64: 128, 256>}, {pipeline_mode = #tpu.pipeline_mode<synchronous>, transform_indices = @transform_4, window_bounds = array<i64: 256, 128>}, {pipeline_mode = #tpu.pipeline_mode<synchronous>, transform_indices = @transform_5, window_bounds = array<i64: 128, 128>}, {pipeline_mode = #tpu.pipeline_mode<synchronous>, transform_indices = @transform_6, window_bounds = array<i64: 3, 256>}, {transform_indices = @transform_7, window_bounds = array<i64: 208, 2>}]} {
    %c0 = arith.constant 0 : index
    %c0_0 = arith.constant 0 : index
    %0 = vector.load %arg1[%c0, %c0_0] : memref<208x2xf32, #tpu.memory_space<vmem>>, vector<208x2xf32>
    %c0_1 = arith.constant 0 : index
    %c0_2 = arith.constant 0 : index
    %1 = vector.load %arg2[%c0_1, %c0_2] : memref<208x1xf32, #tpu.memory_space<vmem>>, vector<208x1xf32>
    %c0_3 = arith.constant 0 : index
    %c0_4 = arith.constant 0 : index
    %2 = vector.load %arg3[%c0_3, %c0_4] : memref<4x128xf32, #tpu.memory_space<vmem>>, vector<4x128xf32>
    %c0_5 = arith.constant 0 : index
    %c0_6 = arith.constant 0 : index
    %3 = vector.load %arg7[%c0_5, %c0_6] : memref<3x256xf32, #tpu.memory_space<vmem>>, vector<3x256xf32>
    %4 = vector.extract_strided_slice %0 {offsets = [0, 0], sizes = [208, 1], strides = [1, 1]} : vector<208x2xf32> to vector<208x1xf32>
    %5 = vector.extract_strided_slice %2 {offsets = [0, 0], sizes = [1, 128], strides = [1, 1]} : vector<4x128xf32> to vector<1x128xf32>
    %6 = vector.broadcast %4 : vector<208x1xf32> to vector<208x128xf32>
    %7 = vector.broadcast %5 : vector<1x128xf32> to vector<208x128xf32>
    %8 = arith.mulf %6, %7 : vector<208x128xf32>
    %9 = vector.extract_strided_slice %0 {offsets = [0, 1], sizes = [208, 1], strides = [1, 1]} : vector<208x2xf32> to vector<208x1xf32>
    %10 = vector.extract_strided_slice %2 {offsets = [1, 0], sizes = [1, 128], strides = [1, 1]} : vector<4x128xf32> to vector<1x128xf32>
    %11 = vector.broadcast %9 : vector<208x1xf32> to vector<208x128xf32>
    %12 = vector.broadcast %10 : vector<1x128xf32> to vector<208x128xf32>
    %13 = arith.mulf %11, %12 : vector<208x128xf32>
    %14 = arith.addf %8, %13 : vector<208x128xf32>
    %15 = vector.extract_strided_slice %2 {offsets = [2, 0], sizes = [1, 128], strides = [1, 1]} : vector<4x128xf32> to vector<1x128xf32>
    %16 = vector.broadcast %1 : vector<208x1xf32> to vector<208x128xf32>
    %17 = vector.broadcast %15 : vector<1x128xf32> to vector<208x128xf32>
    %18 = arith.mulf %16, %17 : vector<208x128xf32>
    %19 = arith.addf %14, %18 : vector<208x128xf32>
    %20 = vector.extract_strided_slice %2 {offsets = [3, 0], sizes = [1, 128], strides = [1, 1]} : vector<4x128xf32> to vector<1x128xf32>
    %21 = vector.broadcast %20 : vector<1x128xf32> to vector<208x128xf32>
    %22 = arith.addf %19, %21 : vector<208x128xf32>
    %cst = arith.constant 0.000000e+00 : f32
    %23 = vector.broadcast %cst : f32 to vector<208x128xf32>
    %24 = arith.cmpf ogt, %22, %23 : vector<208x128xf32>
    %cst_7 = arith.constant 0.000000e+00 : f32
    %25 = vector.broadcast %cst_7 : f32 to vector<208x128xf32>
    %26 = arith.minimumf %22, %25 : vector<208x128xf32>
    %27 = math.exp %26 : vector<208x128xf32>
    %cst_8 = arith.constant 1.000000e+00 : f32
    %28 = vector.broadcast %cst_8 : f32 to vector<208x128xf32>
    %29 = arith.subf %27, %28 : vector<208x128xf32>
    %30 = arith.select %24, %22, %29 : vector<208x128xi1>, vector<208x128xf32>
    %31 = arith.truncf %30 : vector<208x128xf32> to vector<208x128xbf16>
    %c0_9 = arith.constant 0 : index
    %c0_10 = arith.constant 0 : index
    %32 = vector.load %arg4[%c0_9, %c0_10] : memref<128x256xbf16, #tpu.memory_space<vmem>>, vector<128x256xbf16>
    %cst_11 = arith.constant dense<0.000000e+00> : vector<208x256xf32>
    %33 = tpu.matmul %31, %32, %cst_11 {dimension_numbers = #tpu.dot_dimension_numbers<[1], [0], [0], [1], [0, 0, 1, 1], [], []>} : vector<208x128xbf16>, vector<128x256xbf16>, vector<208x256xf32> -> vector<208x256xf32>
    %34 = vector.extract_strided_slice %3 {offsets = [0, 0], sizes = [1, 256], strides = [1, 1]} : vector<3x256xf32> to vector<1x256xf32>
    %35 = vector.broadcast %34 : vector<1x256xf32> to vector<208x256xf32>
    %36 = arith.addf %33, %35 : vector<208x256xf32>
    %cst_12 = arith.constant 0.000000e+00 : f32
    %37 = vector.broadcast %cst_12 : f32 to vector<208x256xf32>
    %38 = arith.cmpf ogt, %36, %37 : vector<208x256xf32>
    %cst_13 = arith.constant 0.000000e+00 : f32
    %39 = vector.broadcast %cst_13 : f32 to vector<208x256xf32>
    %40 = arith.minimumf %36, %39 : vector<208x256xf32>
    %41 = math.exp %40 : vector<208x256xf32>
    %cst_14 = arith.constant 1.000000e+00 : f32
    %42 = vector.broadcast %cst_14 : f32 to vector<208x256xf32>
    %43 = arith.subf %41, %42 : vector<208x256xf32>
    %44 = arith.select %38, %36, %43 : vector<208x256xi1>, vector<208x256xf32>
    %45 = arith.truncf %44 : vector<208x256xf32> to vector<208x256xbf16>
    %c0_15 = arith.constant 0 : index
    %c0_16 = arith.constant 0 : index
    %46 = vector.load %arg5[%c0_15, %c0_16] : memref<256x128xbf16, #tpu.memory_space<vmem>>, vector<256x128xbf16>
    %cst_17 = arith.constant dense<0.000000e+00> : vector<208x128xf32>
    %47 = tpu.matmul %45, %46, %cst_17 {dimension_numbers = #tpu.dot_dimension_numbers<[1], [0], [0], [1], [0, 0, 1, 1], [], []>} : vector<208x256xbf16>, vector<256x128xbf16>, vector<208x128xf32> -> vector<208x128xf32>
    %48 = vector.extract_strided_slice %3 {offsets = [1, 0], sizes = [1, 128], strides = [1, 1]} : vector<3x256xf32> to vector<1x128xf32>
    %49 = vector.broadcast %48 : vector<1x128xf32> to vector<208x128xf32>
    %50 = arith.addf %47, %49 : vector<208x128xf32>
    %cst_18 = arith.constant 0.000000e+00 : f32
    %51 = vector.broadcast %cst_18 : f32 to vector<208x128xf32>
    %52 = arith.cmpf ogt, %50, %51 : vector<208x128xf32>
    %cst_19 = arith.constant 0.000000e+00 : f32
    %53 = vector.broadcast %cst_19 : f32 to vector<208x128xf32>
    %54 = arith.minimumf %50, %53 : vector<208x128xf32>
    %55 = math.exp %54 : vector<208x128xf32>
    %cst_20 = arith.constant 1.000000e+00 : f32
    %56 = vector.broadcast %cst_20 : f32 to vector<208x128xf32>
    %57 = arith.subf %55, %56 : vector<208x128xf32>
    %58 = arith.select %52, %50, %57 : vector<208x128xi1>, vector<208x128xf32>
    %c0_21 = arith.constant 0 : index
    %c0_22 = arith.constant 0 : index
    %59 = vector.load %arg6[%c0_21, %c0_22] : memref<128x128xf32, #tpu.memory_space<vmem>>, vector<128x128xf32>
    %cst_23 = arith.constant dense<0.000000e+00> : vector<208x128xf32>
    %60 = tpu.matmul %58, %59, %cst_23 {dimension_numbers = #tpu.dot_dimension_numbers<[1], [0], [0], [1], [0, 0, 1, 1], [], []>} : vector<208x128xf32>, vector<128x128xf32>, vector<208x128xf32> -> vector<208x128xf32>
    %61 = vector.extract_strided_slice %60 {offsets = [0, 0], sizes = [208, 2], strides = [1, 1]} : vector<208x128xf32> to vector<208x2xf32>
    %62 = vector.extract_strided_slice %3 {offsets = [2, 0], sizes = [1, 2], strides = [1, 1]} : vector<3x256xf32> to vector<1x2xf32>
    %63 = vector.broadcast %62 : vector<1x2xf32> to vector<208x2xf32>
    %64 = arith.addf %61, %63 : vector<208x2xf32>
    %c0_24 = arith.constant 0 : index
    %c0_25 = arith.constant 0 : index
    %65 = vector.load %arg8[%c0_24, %c0_25] : memref<208x2xf32, #tpu.memory_space<vmem>>, vector<208x2xf32>
    tpu.vector_store %arg8[%c0_24, %c0_25], %64 {strides = array<i32>} : memref<208x2xf32, #tpu.memory_space<vmem>>, vector<208x2xf32>,
    return
  }
  func.func @transform_0(%arg0: i32) -> (i32, i32) {
    %c0_i32 = arith.constant 0 : i32
    %c0_i32_0 = arith.constant 0 : i32
    return %arg0, %c0_i32 : i32, i32
  }
  func.func @transform_1(%arg0: i32) -> (i32, i32) {
    %c0_i32 = arith.constant 0 : i32
    %c0_i32_0 = arith.constant 0 : i32
    return %arg0, %c0_i32 : i32, i32
  }
  func.func @transform_2(%arg0: i32) -> (i32, i32) {
    %c0_i32 = arith.constant 0 : i32
    %c0_i32_0 = arith.constant 0 : i32
    %c0_i32_1 = arith.constant 0 : i32
    return %c0_i32, %c0_i32_0 : i32, i32
  }
  func.func @transform_3(%arg0: i32) -> (i32, i32) {
    %c0_i32 = arith.constant 0 : i32
    %c0_i32_0 = arith.constant 0 : i32
    %c0_i32_1 = arith.constant 0 : i32
    return %c0_i32, %c0_i32_0 : i32, i32
  }
  func.func @transform_4(%arg0: i32) -> (i32, i32) {
    %c0_i32 = arith.constant 0 : i32
    %c0_i32_0 = arith.constant 0 : i32
    %c0_i32_1 = arith.constant 0 : i32
    return %c0_i32, %c0_i32_0 : i32, i32
  }
  func.func @transform_5(%arg0: i32) -> (i32, i32) {
    %c0_i32 = arith.constant 0 : i32
    %c0_i32_0 = arith.constant 0 : i32
    %c0_i32_1 = arith.constant 0 : i32
    return %c0_i32, %c0_i32_0 : i32, i32
  }
  func.func @transform_6(%arg0: i32) -> (i32, i32) {
    %c0_i32 = arith.constant 0 : i32
    %c0_i32_0 = arith.constant 0 : i32
    %c0_i32_1 = arith.constant 0 : i32
    return %c0_i32, %c0_i32_0 : i32, i32
  }
  func.func @transform_7(%arg0: i32) -> (i32, i32) {
    %c0_i32 = arith.constant 0 : i32
    %c0_i32_0 = arith.constant 0 : i32
    return %arg0, %c0_i32 : i32, i32
  }
}

</mosaic_0001>

<llo_original>
// kernel: cnf_forward.1
$region0: #{cnf_forward.1}
  #allocation0 [shape = 'u32[]', space=smem, size = 0x4, offset = 0x4, fixed_abs, tag = 'smem constant byte address 0x4 - core index']
  #allocation1 [shape = 'u32[144,128]{1,0:T(1,128)}', space=vmem, size = 0x12000, scoped, tag = 'internal scratch']
  %s0 = inlined_call_operand.vmem [shape: f32[208,2], index: 0, kind: input, shape index: {}]
  %s1 = inlined_call_operand.vmem [shape: f32[208,1], index: 1, kind: input, shape index: {}]
  %s2 = inlined_call_operand.vmem [shape: f32[4,128], index: 2, kind: input, shape index: {}]
  %s3 = inlined_call_operand.vmem [shape: bf16[128,256], index: 3, kind: input, shape index: {}]
  %s4 = inlined_call_operand.vmem [shape: bf16[256,128], index: 4, kind: input, shape index: {}]
  %s5 = inlined_call_operand.vmem [shape: f32[128,128], index: 5, kind: input, shape index: {}]
  %s6 = inlined_call_operand.vmem [shape: f32[3,256], index: 6, kind: input, shape index: {}]
  %s7 = inlined_call_operand.vmem [shape: f32[208,2], index: 7, kind: output, shape index: {}]
  %s8 = sld [smem:[#allocation0]]
  $region38: #{cnf_forward.1} parent=0
    _
  %s10 = ssub.s32 1, %s8
  %s11 = scalar_select 0, %s10, %s8
  // Predicated region
  $region2: #{cnf_forward.1} parent=0 // pred_check
    _
  $region3: #{cnf_forward.1} parent=0 // pred_check_branch
    %13 = sbr.rel (0) target = $region5
  $region4: #{cnf_forward.1} parent=0 // pred_region
    _
  $region5: #{cnf_forward.1} parent=0 // pred_fallthru
    _
  // Predicated region
  $region6: #{cnf_forward.1} parent=0 // pred_check
    _
  $region7: #{cnf_forward.1} parent=0 // pred_check_branch
    %15 = sbr.rel (0) target = $region9
  $region8: #{cnf_forward.1} parent=0 // pred_region
    _
  $region9: #{cnf_forward.1} parent=0 // pred_fallthru
    _
  // Predicated region
  $region10: #{cnf_forward.1} parent=0 // pred_check
    _
  $region11: #{cnf_forward.1} parent=0 // pred_check_branch
    %17 = sbr.rel (0) target = $region13
  $region12: #{cnf_forward.1} parent=0 // pred_region
    _
  $region13: #{cnf_forward.1} parent=0 // pred_fallthru
    _
  // Predicated region
  $region14: #{cnf_forward.1} parent=0 // pred_check
    _
  $region15: #{cnf_forward.1} parent=0 // pred_check_branch
    %19 = sbr.rel (0) target = $region17
  $region16: #{cnf_forward.1} parent=0 // pred_region
    _
  $region17: #{cnf_forward.1} parent=0 // pred_fallthru
    _
  // Predicated region
  $region18: #{cnf_forward.1} parent=0 // pred_check
    _
  $region19: #{cnf_forward.1} parent=0 // pred_check_branch
    %21 = sbr.rel (0) target = $region21
  $region20: #{cnf_forward.1} parent=0 // pred_region
    _
  $region21: #{cnf_forward.1} parent=0 // pred_fallthru
    _
  // Predicated region
  $region22: #{cnf_forward.1} parent=0 // pred_check
    _
  $region23: #{cnf_forward.1} parent=0 // pred_check_branch
    %23 = sbr.rel (0) target = $region25
  $region24: #{cnf_forward.1} parent=0 // pred_region
    _
  $region25: #{cnf_forward.1} parent=0 // pred_fallthru
    _
  // Predicated region
  $region26: #{cnf_forward.1} parent=0 // pred_check
    _
  $region27: #{cnf_forward.1} parent=0 // pred_check_branch
    %25 = sbr.rel (0) target = $region29
  $region28: #{cnf_forward.1} parent=0 // pred_region
    _
  $region29: #{cnf_forward.1} parent=0 // pred_fallthru
    _
  %v27 = vld [vmem:[%s0] sm:$0xff]
  %v28 = vld [vmem:[%s0 + $0x8] sm:$0xff]
  %v29 = vld [vmem:[%s0 + $0x10] sm:$0xff]
  %v30 = vld [vmem:[%s0 + $0x18] sm:$0xff]
  %v31 = vld [vmem:[%s0 + $0x20] sm:$0xff]
  %v32 = vld [vmem:[%s0 + $0x28] sm:$0xff]
  %v33 = vld [vmem:[%s0 + $0x30] sm:$0xff]
  %v34 = vld [vmem:[%s0 + $0x38] sm:$0xff]
  %v35 = vld [vmem:[%s0 + $0x40] sm:$0xff]
  %v36 = vld [vmem:[%s0 + $0x48] sm:$0xff]
  %v37 = vld [vmem:[%s0 + $0x50] sm:$0xff]
  %v38 = vld [vmem:[%s0 + $0x58] sm:$0xff]
  %v39 = vld [vmem:[%s0 + $0x60] sm:$0xff]
  %v40 = vld [vmem:[%s0 + $0x68] sm:$0xff]
  %v41 = vld [vmem:[%s0 + $0x70] sm:$0xff]
  %v42 = vld [vmem:[%s0 + $0x78] sm:$0xff]
  %v43 = vld [vmem:[%s0 + $0x80] sm:$0xff]
  %v44 = vld [vmem:[%s0 + $0x88] sm:$0xff]
  %v45 = vld [vmem:[%s0 + $0x90] sm:$0xff]
  %v46 = vld [vmem:[%s0 + $0x98] sm:$0xff]
  %v47 = vld [vmem:[%s0 + $0xa0] sm:$0xff]
  %v48 = vld [vmem:[%s0 + $0xa8] sm:$0xff]
  %v49 = vld [vmem:[%s0 + $0xb0] sm:$0xff]
  %v50 = vld [vmem:[%s0 + $0xb8] sm:$0xff]
  %v51 = vld [vmem:[%s0 + $0xc0] sm:$0xff]
  %v52 = vld [vmem:[%s0 + $0xc8] sm:$0xff]
  %v53 = vld [vmem:[%s1] sm:$0xff]
  %v54 = vld [vmem:[%s1 + $0x8] sm:$0xff]
  %v55 = vld [vmem:[%s1 + $0x10] sm:$0xff]
  %v56 = vld [vmem:[%s1 + $0x18] sm:$0xff]
  %v57 = vld [vmem:[%s1 + $0x20] sm:$0xff]
  %v58 = vld [vmem:[%s1 + $0x28] sm:$0xff]
  %v59 = vld [vmem:[%s1 + $0x30] sm:$0xff]
  %v60 = vld [vmem:[%s1 + $0x38] sm:$0xff]
  %v61 = vld [vmem:[%s1 + $0x40] sm:$0xff]
  %v62 = vld [vmem:[%s1 + $0x48] sm:$0xff]
  %v63 = vld [vmem:[%s1 + $0x50] sm:$0xff]
  %v64 = vld [vmem:[%s1 + $0x58] sm:$0xff]
  %v65 = vld [vmem:[%s1 + $0x60] sm:$0xff]
  %v66 = vld [vmem:[%s1 + $0x68] sm:$0xff]
  %v67 = vld [vmem:[%s1 + $0x70] sm:$0xff]
  %v68 = vld [vmem:[%s1 + $0x78] sm:$0xff]
  %v69 = vld [vmem:[%s1 + $0x80] sm:$0xff]
  %v70 = vld [vmem:[%s1 + $0x88] sm:$0xff]
  %v71 = vld [vmem:[%s1 + $0x90] sm:$0xff]
  %v72 = vld [vmem:[%s1 + $0x98] sm:$0xff]
  %v73 = vld [vmem:[%s1 + $0xa0] sm:$0xff]
  %v74 = vld [vmem:[%s1 + $0xa8] sm:$0xff]
  %v75 = vld [vmem:[%s1 + $0xb0] sm:$0xff]
  %v76 = vld [vmem:[%s1 + $0xb8] sm:$0xff]
  %v77 = vld [vmem:[%s1 + $0xc0] sm:$0xff]
  %v78 = vld [vmem:[%s1 + $0xc8] sm:$0xff]
  %v79 = vld [vmem:[%s2] sm:$0xf]
  %v80 = vld [vmem:[%s6] sm:$0x77]
  %82 = vset.pattern.permute.xlu0 0
  %83 = vperm.xlu0 %82, %v27
  %v84 = vpop.permute.xlu0 %83
  %87 = vset.pattern.permute.xlu0 0
  %88 = vperm.xlu0 %87, %v28
  %v89 = vpop.permute.xlu0 %88
  %92 = vset.pattern.permute.xlu0 0
  %93 = vperm.xlu0 %92, %v29
  %v94 = vpop.permute.xlu0 %93
  %97 = vset.pattern.permute.xlu0 0
  %98 = vperm.xlu0 %97, %v30
  %v99 = vpop.permute.xlu0 %98
  %102 = vset.pattern.permute.xlu0 0
  %103 = vperm.xlu0 %102, %v31
  %v104 = vpop.permute.xlu0 %103
  %107 = vset.pattern.permute.xlu0 0
  %108 = vperm.xlu0 %107, %v32
  %v109 = vpop.permute.xlu0 %108
  %112 = vset.pattern.permute.xlu0 0
  %113 = vperm.xlu0 %112, %v33
  %v114 = vpop.permute.xlu0 %113
  %117 = vset.pattern.permute.xlu0 0
  %118 = vperm.xlu0 %117, %v34
  %v119 = vpop.permute.xlu0 %118
  %122 = vset.pattern.permute.xlu0 0
  %123 = vperm.xlu0 %122, %v35
  %v124 = vpop.permute.xlu0 %123
  %127 = vset.pattern.permute.xlu0 0
  %128 = vperm.xlu0 %127, %v36
  %v129 = vpop.permute.xlu0 %128
  %132 = vset.pattern.permute.xlu0 0
  %133 = vperm.xlu0 %132, %v37
  %v134 = vpop.permute.xlu0 %133
  %137 = vset.pattern.permute.xlu0 0
  %138 = vperm.xlu0 %137, %v38
  %v139 = vpop.permute.xlu0 %138
  %142 = vset.pattern.permute.xlu0 0
  %143 = vperm.xlu0 %142, %v39
  %v144 = vpop.permute.xlu0 %143
  %147 = vset.pattern.permute.xlu0 0
  %148 = vperm.xlu0 %147, %v40
  %v149 = vpop.permute.xlu0 %148
  %152 = vset.pattern.permute.xlu0 0
  %153 = vperm.xlu0 %152, %v41
  %v154 = vpop.permute.xlu0 %153
  %157 = vset.pattern.permute.xlu0 0
  %158 = vperm.xlu0 %157, %v42
  %v159 = vpop.permute.xlu0 %158
  %162 = vset.pattern.permute.xlu0 0
  %163 = vperm.xlu0 %162, %v43
  %v164 = vpop.permute.xlu0 %163
  %167 = vset.pattern.permute.xlu0 0
  %168 = vperm.xlu0 %167, %v44
  %v169 = vpop.permute.xlu0 %168
  %172 = vset.pattern.permute.xlu0 0
  %173 = vperm.xlu0 %172, %v45
  %v174 = vpop.permute.xlu0 %173
  %177 = vset.pattern.permute.xlu0 0
  %178 = vperm.xlu0 %177, %v46
  %v179 = vpop.permute.xlu0 %178
  %182 = vset.pattern.permute.xlu0 0
  %183 = vperm.xlu0 %182, %v47
  %v184 = vpop.permute.xlu0 %183
  %187 = vset.pattern.permute.xlu0 0
  %188 = vperm.xlu0 %187, %v48
  %v189 = vpop.permute.xlu0 %188
  %192 = vset.pattern.permute.xlu0 0
  %193 = vperm.xlu0 %192, %v49
  %v194 = vpop.permute.xlu0 %193
  %197 = vset.pattern.permute.xlu0 0
  %198 = vperm.xlu0 %197, %v50
  %v199 = vpop.permute.xlu0 %198
  %202 = vset.pattern.permute.xlu0 0
  %203 = vperm.xlu0 %202, %v51
  %v204 = vpop.permute.xlu0 %203
  %207 = vset.pattern.permute.xlu0 0
  %208 = vperm.xlu0 %207, %v52
  %v209 = vpop.permute.xlu0 %208
  %v211 = vlaneseq
  %v212 = vshrl.u32 %v211, 7
  %v213 = vsub.s32 0, %v212
  %v214 = vrot.slane %v79, %v213
  %v215 = vmul.f32 %v84, %v214
  %v216 = vmul.f32 %v89, %v214
  %v217 = vmul.f32 %v94, %v214
  %v218 = vmul.f32 %v99, %v214
  %v219 = vmul.f32 %v104, %v214
  %v220 = vmul.f32 %v109, %v214
  %v221 = vmul.f32 %v114, %v214
  %v222 = vmul.f32 %v119, %v214
  %v223 = vmul.f32 %v124, %v214
  %v224 = vmul.f32 %v129, %v214
  %v225 = vmul.f32 %v134, %v214
  %v226 = vmul.f32 %v139, %v214
  %v227 = vmul.f32 %v144, %v214
  %v228 = vmul.f32 %v149, %v214
  %v229 = vmul.f32 %v154, %v214
  %v230 = vmul.f32 %v159, %v214
  %v231 = vmul.f32 %v164, %v214
  %v232 = vmul.f32 %v169, %v214
  %v233 = vmul.f32 %v174, %v214
  %v234 = vmul.f32 %v179, %v214
  %v235 = vmul.f32 %v184, %v214
  %v236 = vmul.f32 %v189, %v214
  %v237 = vmul.f32 %v194, %v214
  %v238 = vmul.f32 %v199, %v214
  %v239 = vmul.f32 %v204, %v214
  %v240 = vmul.f32 %v209, %v214
  %241 = vset.pattern.permute.xlu0 1
  %242 = vperm.xlu0 %241, %v27
  %v243 = vpop.permute.xlu0 %242
  %245 = vset.pattern.permute.xlu0 1
  %246 = vperm.xlu0 %245, %v28
  %v247 = vpop.permute.xlu0 %246
  %249 = vset.pattern.permute.xlu0 1
  %250 = vperm.xlu0 %249, %v29
  %v251 = vpop.permute.xlu0 %250
  %253 = vset.pattern.permute.xlu0 1
  %254 = vperm.xlu0 %253, %v30
  %v255 = vpop.permute.xlu0 %254
  %257 = vset.pattern.permute.xlu0 1
  %258 = vperm.xlu0 %257, %v31
  %v259 = vpop.permute.xlu0 %258
  %261 = vset.pattern.permute.xlu0 1
  %262 = vperm.xlu0 %261, %v32
  %v263 = vpop.permute.xlu0 %262
  %265 = vset.pattern.permute.xlu0 1
  %266 = vperm.xlu0 %265, %v33
  %v267 = vpop.permute.xlu0 %266
  %269 = vset.pattern.permute.xlu0 1
  %270 = vperm.xlu0 %269, %v34
  %v271 = vpop.permute.xlu0 %270
  %273 = vset.pattern.permute.xlu0 1
  %274 = vperm.xlu0 %273, %v35
  %v275 = vpop.permute.xlu0 %274
  %277 = vset.pattern.permute.xlu0 1
  %278 = vperm.xlu0 %277, %v36
  %v279 = vpop.permute.xlu0 %278
  %281 = vset.pattern.permute.xlu0 1
  %282 = vperm.xlu0 %281, %v37
  %v283 = vpop.permute.xlu0 %282
  %285 = vset.pattern.permute.xlu0 1
  %286 = vperm.xlu0 %285, %v38
  %v287 = vpop.permute.xlu0 %286
  %289 = vset.pattern.permute.xlu0 1
  %290 = vperm.xlu0 %289, %v39
  %v291 = vpop.permute.xlu0 %290
  %293 = vset.pattern.permute.xlu0 1
  %294 = vperm.xlu0 %293, %v40
  %v295 = vpop.permute.xlu0 %294
  %297 = vset.pattern.permute.xlu0 1
  %298 = vperm.xlu0 %297, %v41
  %v299 = vpop.permute.xlu0 %298
  %301 = vset.pattern.permute.xlu0 1
  %302 = vperm.xlu0 %301, %v42
  %v303 = vpop.permute.xlu0 %302
  %305 = vset.pattern.permute.xlu0 1
  %306 = vperm.xlu0 %305, %v43
  %v307 = vpop.permute.xlu0 %306
  %309 = vset.pattern.permute.xlu0 1
  %310 = vperm.xlu0 %309, %v44
  %v311 = vpop.permute.xlu0 %310
  %313 = vset.pattern.permute.xlu0 1
  %314 = vperm.xlu0 %313, %v45
  %v315 = vpop.permute.xlu0 %314
  %317 = vset.pattern.permute.xlu0 1
  %318 = vperm.xlu0 %317, %v46
  %v319 = vpop.permute.xlu0 %318
  %321 = vset.pattern.permute.xlu0 1
  %322 = vperm.xlu0 %321, %v47
  %v323 = vpop.permute.xlu0 %322
  %325 = vset.pattern.permute.xlu0 1
  %326 = vperm.xlu0 %325, %v48
  %v327 = vpop.permute.xlu0 %326
  %329 = vset.pattern.permute.xlu0 1
  %330 = vperm.xlu0 %329, %v49
  %v331 = vpop.permute.xlu0 %330
  %333 = vset.pattern.permute.xlu0 1
  %334 = vperm.xlu0 %333, %v50
  %v335 = vpop.permute.xlu0 %334
  %337 = vset.pattern.permute.xlu0 1
  %338 = vperm.xlu0 %337, %v51
  %v339 = vpop.permute.xlu0 %338
  %341 = vset.pattern.permute.xlu0 1
  %342 = vperm.xlu0 %341, %v52
  %v343 = vpop.permute.xlu0 %342
  %v345 = vlaneseq
  %v346 = vshrl.u32 %v345, 7
  %v347 = vsub.s32 1, %v346
  %v348 = vrot.slane %v79, %v347
  %v349 = vmul.f32 %v243, %v348
  %v350 = vmul.f32 %v247, %v348
  %v351 = vmul.f32 %v251, %v348
  %v352 = vmul.f32 %v255, %v348
  %v353 = vmul.f32 %v259, %v348
  %v354 = vmul.f32 %v263, %v348
  %v355 = vmul.f32 %v267, %v348
  %v356 = vmul.f32 %v271, %v348
  %v357 = vmul.f32 %v275, %v348
  %v358 = vmul.f32 %v279, %v348
  %v359 = vmul.f32 %v283, %v348
  %v360 = vmul.f32 %v287, %v348
  %v361 = vmul.f32 %v291, %v348
  %v362 = vmul.f32 %v295, %v348
  %v363 = vmul.f32 %v299, %v348
  %v364 = vmul.f32 %v303, %v348
  %v365 = vmul.f32 %v307, %v348
  %v366 = vmul.f32 %v311, %v348
  %v367 = vmul.f32 %v315, %v348
  %v368 = vmul.f32 %v319, %v348
  %v369 = vmul.f32 %v323, %v348
  %v370 = vmul.f32 %v327, %v348
  %v371 = vmul.f32 %v331, %v348
  %v372 = vmul.f32 %v335, %v348
  %v373 = vmul.f32 %v339, %v348
  %v374 = vmul.f32 %v343, %v348
  %v375 = vadd.f32 %v215, %v349
  %v376 = vadd.f32 %v216, %v350
  %v377 = vadd.f32 %v217, %v351
  %v378 = vadd.f32 %v218, %v352
  %v379 = vadd.f32 %v219, %v353
  %v380 = vadd.f32 %v220, %v354
  %v381 = vadd.f32 %v221, %v355
  %v382 = vadd.f32 %v222, %v356
  %v383 = vadd.f32 %v223, %v357
  %v384 = vadd.f32 %v224, %v358
  %v385 = vadd.f32 %v225, %v359
  %v386 = vadd.f32 %v226, %v360
  %v387 = vadd.f32 %v227, %v361
  %v388 = vadd.f32 %v228, %v362
  %v389 = vadd.f32 %v229, %v363
  %v390 = vadd.f32 %v230, %v364
  %v391 = vadd.f32 %v231, %v365
  %v392 = vadd.f32 %v232, %v366
  %v393 = vadd.f32 %v233, %v367
  %v394 = vadd.f32 %v234, %v368
  %v395 = vadd.f32 %v235, %v369
  %v396 = vadd.f32 %v236, %v370
  %v397 = vadd.f32 %v237, %v371
  %v398 = vadd.f32 %v238, %v372
  %v399 = vadd.f32 %v239, %v373
  %v400 = vadd.f32 %v240, %v374
  %402 = vset.pattern.permute.xlu0 0
  %403 = vperm.xlu0 %402, %v53
  %v404 = vpop.permute.xlu0 %403
  %407 = vset.pattern.permute.xlu0 0
  %408 = vperm.xlu0 %407, %v54
  %v409 = vpop.permute.xlu0 %408
  %412 = vset.pattern.permute.xlu0 0
  %413 = vperm.xlu0 %412, %v55
  %v414 = vpop.permute.xlu0 %413
  %417 = vset.pattern.permute.xlu0 0
  %418 = vperm.xlu0 %417, %v56
  %v419 = vpop.permute.xlu0 %418
  %422 = vset.pattern.permute.xlu0 0
  %423 = vperm.xlu0 %422, %v57
  %v424 = vpop.permute.xlu0 %423
  %427 = vset.pattern.permute.xlu0 0
  %428 = vperm.xlu0 %427, %v58
  %v429 = vpop.permute.xlu0 %428
  %432 = vset.pattern.permute.xlu0 0
  %433 = vperm.xlu0 %432, %v59
  %v434 = vpop.permute.xlu0 %433
  %437 = vset.pattern.permute.xlu0 0
  %438 = vperm.xlu0 %437, %v60
  %v439 = vpop.permute.xlu0 %438
  %442 = vset.pattern.permute.xlu0 0
  %443 = vperm.xlu0 %442, %v61
  %v444 = vpop.permute.xlu0 %443
  %447 = vset.pattern.permute.xlu0 0
  %448 = vperm.xlu0 %447, %v62
  %v449 = vpop.permute.xlu0 %448
  %452 = vset.pattern.permute.xlu0 0
  %453 = vperm.xlu0 %452, %v63
  %v454 = vpop.permute.xlu0 %453
  %457 = vset.pattern.permute.xlu0 0
  %458 = vperm.xlu0 %457, %v64
  %v459 = vpop.permute.xlu0 %458
  %462 = vset.pattern.permute.xlu0 0
  %463 = vperm.xlu0 %462, %v65
  %v464 = vpop.permute.xlu0 %463
  %467 = vset.pattern.permute.xlu0 0
  %468 = vperm.xlu0 %467, %v66
  %v469 = vpop.permute.xlu0 %468
  %472 = vset.pattern.permute.xlu0 0
  %473 = vperm.xlu0 %472, %v67
  %v474 = vpop.permute.xlu0 %473
  %477 = vset.pattern.permute.xlu0 0
  %478 = vperm.xlu0 %477, %v68
  %v479 = vpop.permute.xlu0 %478
  %482 = vset.pattern.permute.xlu0 0
  %483 = vperm.xlu0 %482, %v69
  %v484 = vpop.permute.xlu0 %483
  %487 = vset.pattern.permute.xlu0 0
  %488 = vperm.xlu0 %487, %v70
  %v489 = vpop.permute.xlu0 %488
  %492 = vset.pattern.permute.xlu0 0
  %493 = vperm.xlu0 %492, %v71
  %v494 = vpop.permute.xlu0 %493
  %497 = vset.pattern.permute.xlu0 0
  %498 = vperm.xlu0 %497, %v72
  %v499 = vpop.permute.xlu0 %498
  %502 = vset.pattern.permute.xlu0 0
  %503 = vperm.xlu0 %502, %v73
  %v504 = vpop.permute.xlu0 %503
  %507 = vset.pattern.permute.xlu0 0
  %508 = vperm.xlu0 %507, %v74
  %v509 = vpop.permute.xlu0 %508
  %512 = vset.pattern.permute.xlu0 0
  %513 = vperm.xlu0 %512, %v75
  %v514 = vpop.permute.xlu0 %513
  %517 = vset.pattern.permute.xlu0 0
  %518 = vperm.xlu0 %517, %v76
  %v519 = vpop.permute.xlu0 %518
  %522 = vset.pattern.permute.xlu0 0
  %523 = vperm.xlu0 %522, %v77
  %v524 = vpop.permute.xlu0 %523
  %527 = vset.pattern.permute.xlu0 0
  %528 = vperm.xlu0 %527, %v78
  %v529 = vpop.permute.xlu0 %528
  %v531 = vlaneseq
  %v532 = vshrl.u32 %v531, 7
  %v533 = vsub.s32 2, %v532
  %v534 = vrot.slane %v79, %v533
  %v535 = vmul.f32 %v404, %v534
  %v536 = vmul.f32 %v409, %v534
  %v537 = vmul.f32 %v414, %v534
  %v538 = vmul.f32 %v419, %v534
  %v539 = vmul.f32 %v424, %v534
  %v540 = vmul.f32 %v429, %v534
  %v541 = vmul.f32 %v434, %v534
  %v542 = vmul.f32 %v439, %v534
  %v543 = vmul.f32 %v444, %v534
  %v544 = vmul.f32 %v449, %v534
  %v545 = vmul.f32 %v454, %v534
  %v546 = vmul.f32 %v459, %v534
  %v547 = vmul.f32 %v464, %v534
  %v548 = vmul.f32 %v469, %v534
  %v549 = vmul.f32 %v474, %v534
  %v550 = vmul.f32 %v479, %v534
  %v551 = vmul.f32 %v484, %v534
  %v552 = vmul.f32 %v489, %v534
  %v553 = vmul.f32 %v494, %v534
  %v554 = vmul.f32 %v499, %v534
  %v555 = vmul.f32 %v504, %v534
  %v556 = vmul.f32 %v509, %v534
  %v557 = vmul.f32 %v514, %v534
  %v558 = vmul.f32 %v519, %v534
  %v559 = vmul.f32 %v524, %v534
  %v560 = vmul.f32 %v529, %v534
  %v561 = vadd.f32 %v375, %v535
  %v562 = vadd.f32 %v376, %v536
  %v563 = vadd.f32 %v377, %v537
  %v564 = vadd.f32 %v378, %v538
  %v565 = vadd.f32 %v379, %v539
  %v566 = vadd.f32 %v380, %v540
  %v567 = vadd.f32 %v381, %v541
  %v568 = vadd.f32 %v382, %v542
  %v569 = vadd.f32 %v383, %v543
  %v570 = vadd.f32 %v384, %v544
  %v571 = vadd.f32 %v385, %v545
  %v572 = vadd.f32 %v386, %v546
  %v573 = vadd.f32 %v387, %v547
  %v574 = vadd.f32 %v388, %v548
  %v575 = vadd.f32 %v389, %v549
  %v576 = vadd.f32 %v390, %v550
  %v577 = vadd.f32 %v391, %v551
  %v578 = vadd.f32 %v392, %v552
  %v579 = vadd.f32 %v393, %v553
  %v580 = vadd.f32 %v394, %v554
  %v581 = vadd.f32 %v395, %v555
  %v582 = vadd.f32 %v396, %v556
  %v583 = vadd.f32 %v397, %v557
  %v584 = vadd.f32 %v398, %v558
  %v585 = vadd.f32 %v399, %v559
  %v586 = vadd.f32 %v400, %v560
  %v587 = vlaneseq
  %v588 = vshrl.u32 %v587, 7
  %v589 = vsub.s32 3, %v588
  %v590 = vrot.slane %v79, %v589
  %v591 = vadd.f32 %v561, %v590
  %v592 = vadd.f32 %v562, %v590
  %v593 = vadd.f32 %v563, %v590
  %v594 = vadd.f32 %v564, %v590
  %v595 = vadd.f32 %v565, %v590
  %v596 = vadd.f32 %v566, %v590
  %v597 = vadd.f32 %v567, %v590
  %v598 = vadd.f32 %v568, %v590
  %v599 = vadd.f32 %v569, %v590
  %v600 = vadd.f32 %v570, %v590
  %v601 = vadd.f32 %v571, %v590
  %v602 = vadd.f32 %v572, %v590
  %v603 = vadd.f32 %v573, %v590
  %v604 = vadd.f32 %v574, %v590
  %v605 = vadd.f32 %v575, %v590
  %v606 = vadd.f32 %v576, %v590
  %v607 = vadd.f32 %v577, %v590
  %v608 = vadd.f32 %v578, %v590
  %v609 = vadd.f32 %v579, %v590
  %v610 = vadd.f32 %v580, %v590
  %v611 = vadd.f32 %v581, %v590
  %v612 = vadd.f32 %v582, %v590
  %v613 = vadd.f32 %v583, %v590
  %v614 = vadd.f32 %v584, %v590
  %v615 = vadd.f32 %v585, %v590
  %v616 = vadd.f32 %v586, %v590
  %vm617 = vcmp.gt.f32.partialorder %v591, 0.0
  %vm618 = vcmp.gt.f32.partialorder %v592, 0.0
  %vm619 = vcmp.gt.f32.partialorder %v593, 0.0
  %vm620 = vcmp.gt.f32.partialorder %v594, 0.0
  %vm621 = vcmp.gt.f32.partialorder %v595, 0.0
  %vm622 = vcmp.gt.f32.partialorder %v596, 0.0
  %vm623 = vcmp.gt.f32.partialorder %v597, 0.0
  %vm624 = vcmp.gt.f32.partialorder %v598, 0.0
  %vm625 = vcmp.gt.f32.partialorder %v599, 0.0
  %vm626 = vcmp.gt.f32.partialorder %v600, 0.0
  %vm627 = vcmp.gt.f32.partialorder %v601, 0.0
  %vm628 = vcmp.gt.f32.partialorder %v602, 0.0
  %vm629 = vcmp.gt.f32.partialorder %v603, 0.0
  %vm630 = vcmp.gt.f32.partialorder %v604, 0.0
  %vm631 = vcmp.gt.f32.partialorder %v605, 0.0
  %vm632 = vcmp.gt.f32.partialorder %v606, 0.0
  %vm633 = vcmp.gt.f32.partialorder %v607, 0.0
  %vm634 = vcmp.gt.f32.partialorder %v608, 0.0
  %vm635 = vcmp.gt.f32.partialorder %v609, 0.0
  %vm636 = vcmp.gt.f32.partialorder %v610, 0.0
  %vm637 = vcmp.gt.f32.partialorder %v611, 0.0
  %vm638 = vcmp.gt.f32.partialorder %v612, 0.0
  %vm639 = vcmp.gt.f32.partialorder %v613, 0.0
  %vm640 = vcmp.gt.f32.partialorder %v614, 0.0
  %vm641 = vcmp.gt.f32.partialorder %v615, 0.0
  %vm642 = vcmp.gt.f32.partialorder %v616, 0.0
  %v643 = vmin.f32 %v591, 0.0
  %v644 = vmin.f32 %v592, 0.0
  %v645 = vmin.f32 %v593, 0.0
  %v646 = vmin.f32 %v594, 0.0
  %v647 = vmin.f32 %v595, 0.0
  %v648 = vmin.f32 %v596, 0.0
  %v649 = vmin.f32 %v597, 0.0
  %v650 = vmin.f32 %v598, 0.0
  %v651 = vmin.f32 %v599, 0.0
  %v652 = vmin.f32 %v600, 0.0
  %v653 = vmin.f32 %v601, 0.0
  %v654 = vmin.f32 %v602, 0.0
  %v655 = vmin.f32 %v603, 0.0
  %v656 = vmin.f32 %v604, 0.0
  %v657 = vmin.f32 %v605, 0.0
  %v658 = vmin.f32 %v606, 0.0
  %v659 = vmin.f32 %v607, 0.0
  %v660 = vmin.f32 %v608, 0.0
  %v661 = vmin.f32 %v609, 0.0
  %v662 = vmin.f32 %v610, 0.0
  %v663 = vmin.f32 %v611, 0.0
  %v664 = vmin.f32 %v612, 0.0
  %v665 = vmin.f32 %v613, 0.0
  %v666 = vmin.f32 %v614, 0.0
  %v667 = vmin.f32 %v615, 0.0
  %v668 = vmin.f32 %v616, 0.0
  %v669 = vmul.f32 %v643, 1.442695
  %v670 = vpow.pop %v669
  %v671 = vmul.f32 %v644, 1.442695
  %v672 = vpow.pop %v671
  %v673 = vmul.f32 %v645, 1.442695
  %v674 = vpow.pop %v673
  %v675 = vmul.f32 %v646, 1.442695
  %v676 = vpow.pop %v675
  %v677 = vmul.f32 %v647, 1.442695
  %v678 = vpow.pop %v677
  %v679 = vmul.f32 %v648, 1.442695
  %v680 = vpow.pop %v679
  %v681 = vmul.f32 %v649, 1.442695
  %v682 = vpow.pop %v681
  %v683 = vmul.f32 %v650, 1.442695
  %v684 = vpow.pop %v683
  %v685 = vmul.f32 %v651, 1.442695
  %v686 = vpow.pop %v685
  %v687 = vmul.f32 %v652, 1.442695
  %v688 = vpow.pop %v687
  %v689 = vmul.f32 %v653, 1.442695
  %v690 = vpow.pop %v689
  %v691 = vmul.f32 %v654, 1.442695
  %v692 = vpow.pop %v691
  %v693 = vmul.f32 %v655, 1.442695
  %v694 = vpow.pop %v693
  %v695 = vmul.f32 %v656, 1.442695
  %v696 = vpow.pop %v695
  %v697 = vmul.f32 %v657, 1.442695
  %v698 = vpow.pop %v697
  %v699 = vmul.f32 %v658, 1.442695
  %v700 = vpow.pop %v699
  %v701 = vmul.f32 %v659, 1.442695
  %v702 = vpow.pop %v701
  %v703 = vmul.f32 %v660, 1.442695
  %v704 = vpow.pop %v703
  %v705 = vmul.f32 %v661, 1.442695
  %v706 = vpow.pop %v705
  %v707 = vmul.f32 %v662, 1.442695
  %v708 = vpow.pop %v707
  %v709 = vmul.f32 %v663, 1.442695
  %v710 = vpow.pop %v709
  %v711 = vmul.f32 %v664, 1.442695
  %v712 = vpow.pop %v711
  %v713 = vmul.f32 %v665, 1.442695
  %v714 = vpow.pop %v713
  %v715 = vmul.f32 %v666, 1.442695
  %v716 = vpow.pop %v715
  %v717 = vmul.f32 %v667, 1.442695
  %v718 = vpow.pop %v717
  %v719 = vmul.f32 %v668, 1.442695
  %v720 = vpow.pop %v719
  %v721 = vsub.f32 %v670, 1.0
  %v722 = vsub.f32 %v672, 1.0
  %v723 = vsub.f32 %v674, 1.0
  %v724 = vsub.f32 %v676, 1.0
  %v725 = vsub.f32 %v678, 1.0
  %v726 = vsub.f32 %v680, 1.0
  %v727 = vsub.f32 %v682, 1.0
  %v728 = vsub.f32 %v684, 1.0
  %v729 = vsub.f32 %v686, 1.0
  %v730 = vsub.f32 %v688, 1.0
  %v731 = vsub.f32 %v690, 1.0
  %v732 = vsub.f32 %v692, 1.0
  %v733 = vsub.f32 %v694, 1.0
  %v734 = vsub.f32 %v696, 1.0
  %v735 = vsub.f32 %v698, 1.0
  %v736 = vsub.f32 %v700, 1.0
  %v737 = vsub.f32 %v702, 1.0
  %v738 = vsub.f32 %v704, 1.0
  %v739 = vsub.f32 %v706, 1.0
  %v740 = vsub.f32 %v708, 1.0
  %v741 = vsub.f32 %v710, 1.0
  %v742 = vsub.f32 %v712, 1.0
  %v743 = vsub.f32 %v714, 1.0
  %v744 = vsub.f32 %v716, 1.0
  %v745 = vsub.f32 %v718, 1.0
  %v746 = vsub.f32 %v720, 1.0
  %v747 = vsel %vm617, %v591, %v721
  %v748 = vsel %vm618, %v592, %v722
  %v749 = vsel %vm619, %v593, %v723
  %v750 = vsel %vm620, %v594, %v724
  %v751 = vsel %vm621, %v595, %v725
  %v752 = vsel %vm622, %v596, %v726
  %v753 = vsel %vm623, %v597, %v727
  %v754 = vsel %vm624, %v598, %v728
  %v755 = vsel %vm625, %v599, %v729
  %v756 = vsel %vm626, %v600, %v730
  %v757 = vsel %vm627, %v601, %v731
  %v758 = vsel %vm628, %v602, %v732
  %v759 = vsel %vm629, %v603, %v733
  %v760 = vsel %vm630, %v604, %v734
  %v761 = vsel %vm631, %v605, %v735
  %v762 = vsel %vm632, %v606, %v736
  %v763 = vsel %vm633, %v607, %v737
  %v764 = vsel %vm634, %v608, %v738
  %v765 = vsel %vm635, %v609, %v739
  %v766 = vsel %vm636, %v610, %v740
  %v767 = vsel %vm637, %v611, %v741
  %v768 = vsel %vm638, %v612, %v742
  %v769 = vsel %vm639, %v613, %v743
  %v770 = vsel %vm640, %v614, %v744
  %v771 = vsel %vm641, %v615, %v745
  %v772 = vsel %vm642, %v616, %v746
  %v773 = vpack.c.bf16 %v748, %v747
  %v774 = vpack.c.bf16 %v750, %v749
  %v775 = vpack.c.bf16 %v752, %v751
  %v776 = vpack.c.bf16 %v754, %v753
  %v777 = vpack.c.bf16 %v756, %v755
  %v778 = vpack.c.bf16 %v758, %v757
  %v779 = vpack.c.bf16 %v760, %v759
  %v780 = vpack.c.bf16 %v762, %v761
  %v781 = vpack.c.bf16 %v764, %v763
  %v782 = vpack.c.bf16 %v766, %v765
  %v783 = vpack.c.bf16 %v768, %v767
  %v784 = vpack.c.bf16 %v770, %v769
  %v785 = vpack.c.bf16 %v772, %v771
  %v786 = vld [vmem:[%s3] sm:$0xff]
  %v787 = vld [vmem:[%s3 + $0x8] sm:$0xff]
  %v788 = vld [vmem:[%s3 + $0x10] sm:$0xff]
  %v789 = vld [vmem:[%s3 + $0x18] sm:$0xff]
  %v790 = vld [vmem:[%s3 + $0x20] sm:$0xff]
  %v791 = vld [vmem:[%s3 + $0x28] sm:$0xff]
  %v792 = vld [vmem:[%s3 + $0x30] sm:$0xff]
  %v793 = vld [vmem:[%s3 + $0x38] sm:$0xff]
  %v794 = vld [vmem:[%s3 + $0x40] sm:$0xff]
  %v795 = vld [vmem:[%s3 + $0x48] sm:$0xff]
  %v796 = vld [vmem:[%s3 + $0x50] sm:$0xff]
  %v797 = vld [vmem:[%s3 + $0x58] sm:$0xff]
  %v798 = vld [vmem:[%s3 + $0x60] sm:$0xff]
  %v799 = vld [vmem:[%s3 + $0x68] sm:$0xff]
  %v800 = vld [vmem:[%s3 + $0x70] sm:$0xff]
  %v801 = vld [vmem:[%s3 + $0x78] sm:$0xff]
  %v803 = vlaneseq
  %v804 = vshrl.u32 %v803, 7
  %v805 = vsub.s32 0, %v804
  %v806 = vrot.slane %v80, %v805
  %v807 = vlaneseq
  %v808 = vshrl.u32 %v807, 7
  %v809 = vsub.s32 4, %v808
  %v810 = vrot.slane %v80, %v809
  %v813 = vlaneseq
  %v814 = vshrl.u32 %v813, 7
  %v815 = vsub.s32 0, %v814
  %v816 = vrot.slane %v806, %v815
  %v817 = vlaneseq
  %v818 = vshrl.u32 %v817, 7
  %v819 = vsub.s32 0, %v818
  %v820 = vrot.slane %v810, %v819
  %v837 = vunpack.c.l.b16 %v786
  %v838 = vunpack.c.h.b16 %v786
  %v839 = vunpack.c.l.b16 %v787
  %v840 = vunpack.c.h.b16 %v787
  %v841 = vunpack.c.l.b16 %v788
  %v842 = vunpack.c.h.b16 %v788
  %v843 = vunpack.c.l.b16 %v789
  %v844 = vunpack.c.h.b16 %v789
  %v845 = vunpack.c.l.b16 %v790
  %v846 = vunpack.c.h.b16 %v790
  %v847 = vunpack.c.l.b16 %v791
  %v848 = vunpack.c.h.b16 %v791
  %v849 = vunpack.c.l.b16 %v792
  %v850 = vunpack.c.h.b16 %v792
  %v851 = vunpack.c.l.b16 %v793
  %v852 = vunpack.c.h.b16 %v793
  %v853 = vunpack.c.l.b16 %v794
  %v854 = vunpack.c.h.b16 %v794
  %v855 = vunpack.c.l.b16 %v795
  %v856 = vunpack.c.h.b16 %v795
  %v857 = vunpack.c.l.b16 %v796
  %v858 = vunpack.c.h.b16 %v796
  %v859 = vunpack.c.l.b16 %v797
  %v860 = vunpack.c.h.b16 %v797
  %v861 = vunpack.c.l.b16 %v798
  %v862 = vunpack.c.h.b16 %v798
  %v863 = vunpack.c.l.b16 %v799
  %v864 = vunpack.c.h.b16 %v799
  %v865 = vunpack.c.l.b16 %v800
  %v866 = vunpack.c.h.b16 %v800
  %v867 = vunpack.c.l.b16 %v801
  %v868 = vunpack.c.h.b16 %v801
  %v869 = vpack.c.b16 %v839, %v837
  %v870 = vpack.c.b16 %v840, %v838
  %v871 = vpack.c.b16 %v843, %v841
  %v872 = vpack.c.b16 %v844, %v842
  %v873 = vpack.c.b16 %v847, %v845
  %v874 = vpack.c.b16 %v848, %v846
  %v875 = vpack.c.b16 %v851, %v849
  %v876 = vpack.c.b16 %v852, %v850
  %v877 = vpack.c.b16 %v855, %v853
  %v878 = vpack.c.b16 %v856, %v854
  %v879 = vpack.c.b16 %v859, %v857
  %v880 = vpack.c.b16 %v860, %v858
  %v881 = vpack.c.b16 %v863, %v861
  %v882 = vpack.c.b16 %v864, %v862
  %v883 = vpack.c.b16 %v867, %v865
  %v884 = vpack.c.b16 %v868, %v866
  %901 = vmatprep.subr.bf16.mxu0 %v870
  %902 = vmatpush1.bf16.msra.mxu0 %v869
  %903 = vmatprep.subr.bf16.mxu0 %v872
  %904 = vmatpush1.bf16.msra.mxu0 %v871
  %905 = vmatprep.subr.bf16.mxu0 %v874
  %906 = vmatpush1.bf16.msra.mxu0 %v873
  %907 = vmatprep.subr.bf16.mxu0 %v876
  %908 = vmatpush1.bf16.msra.mxu0 %v875
  %909 = vmatprep.subr.bf16.mxu0 %v878
  %910 = vmatpush1.bf16.msra.mxu0 %v877
  %911 = vmatprep.subr.bf16.mxu0 %v880
  %912 = vmatpush1.bf16.msra.mxu0 %v879
  %913 = vmatprep.subr.bf16.mxu0 %v882
  %914 = vmatpush1.bf16.msra.mxu0 %v881
  %915 = vmatprep.subr.bf16.mxu0 %v884
  %916 = vmatpush1.bf16.msra.mxu0 %v883
  %917 = vmatprep.subr.bf16.mxu0 0
  %918 = vmatpush1.bf16.msra.mxu0 0
  %919 = vmatprep.subr.bf16.mxu0 0
  %920 = vmatpush1.bf16.msra.mxu0 0
  %921 = vmatprep.subr.bf16.mxu0 0
  %922 = vmatpush1.bf16.msra.mxu0 0
  %923 = vmatprep.subr.bf16.mxu0 0
  %924 = vmatpush1.bf16.msra.mxu0 0
  %925 = vmatprep.subr.bf16.mxu0 0
  %926 = vmatpush1.bf16.msra.mxu0 0
  %927 = vmatprep.subr.bf16.mxu0 0
  %928 = vmatpush1.bf16.msra.mxu0 0
  %929 = vmatprep.subr.bf16.mxu0 0
  %930 = vmatpush1.bf16.msra.mxu0 0
  %931 = vmatprep.subr.bf16.mxu0 0
  %932 = vmatpush1.bf16.msra.mxu0 0
  %933 = vmatprep.mubr.bf16.mxu0 0
  %934 = vmatmul.mubr.bf16.gmra.mrb[0].mxu0 %v773
  %v935 = vpop.f32.mrb[0].mxu0
  %v936 = vadd.f32 %v816, %v935
  %v937 = vpop.f32.mrb[0].mxu0
  %v938 = vadd.f32 %v820, %v937
  %v939 = vpop.f32.mrb[0].mxu0
  %v940 = vadd.f32 %v816, %v939
  %v941 = vpop.f32.mrb[0].mxu0
  %v942 = vadd.f32 %v820, %v941
  %943 = vmatprep.mubr.bf16.mxu0 0
  %944 = vmatmul.mubr.bf16.gmra.mrb[0].mxu0 %v774
  %v945 = vpop.f32.mrb[0].mxu0
  %v946 = vadd.f32 %v816, %v945
  %v947 = vpop.f32.mrb[0].mxu0
  %v948 = vadd.f32 %v820, %v947
  %v949 = vpop.f32.mrb[0].mxu0
  %v950 = vadd.f32 %v816, %v949
  %v951 = vpop.f32.mrb[0].mxu0
  %v952 = vadd.f32 %v820, %v951
  %953 = vmatprep.mubr.bf16.mxu0 0
  %954 = vmatmul.mubr.bf16.gmra.mrb[0].mxu0 %v775
  %v955 = vpop.f32.mrb[0].mxu0
  %v956 = vadd.f32 %v816, %v955
  %v957 = vpop.f32.mrb[0].mxu0
  %v958 = vadd.f32 %v820, %v957
  %v959 = vpop.f32.mrb[0].mxu0
  %v960 = vadd.f32 %v816, %v959
  %v961 = vpop.f32.mrb[0].mxu0
  %v962 = vadd.f32 %v820, %v961
  %963 = vmatprep.mubr.bf16.mxu0 0
  %964 = vmatmul.mubr.bf16.gmra.mrb[0].mxu0 %v776
  %v965 = vpop.f32.mrb[0].mxu0
  %v966 = vadd.f32 %v816, %v965
  %v967 = vpop.f32.mrb[0].mxu0
  %v968 = vadd.f32 %v820, %v967
  %v969 = vpop.f32.mrb[0].mxu0
  %v970 = vadd.f32 %v816, %v969
  %v971 = vpop.f32.mrb[0].mxu0
  %v972 = vadd.f32 %v820, %v971
  %973 = vmatprep.mubr.bf16.mxu0 0
  %974 = vmatmul.mubr.bf16.gmra.mrb[0].mxu0 %v777
  %v975 = vpop.f32.mrb[0].mxu0
  %v976 = vadd.f32 %v816, %v975
  %v977 = vpop.f32.mrb[0].mxu0
  %v978 = vadd.f32 %v820, %v977
  %v979 = vpop.f32.mrb[0].mxu0
  %v980 = vadd.f32 %v816, %v979
  %v981 = vpop.f32.mrb[0].mxu0
  %v982 = vadd.f32 %v820, %v981
  %983 = vmatprep.mubr.bf16.mxu0 0
  %984 = vmatmul.mubr.bf16.gmra.mrb[0].mxu0 %v778
  %v985 = vpop.f32.mrb[0].mxu0
  %v986 = vadd.f32 %v816, %v985
  %v987 = vpop.f32.mrb[0].mxu0
  %v988 = vadd.f32 %v820, %v987
  %v989 = vpop.f32.mrb[0].mxu0
  %v990 = vadd.f32 %v816, %v989
  %v991 = vpop.f32.mrb[0].mxu0
  %v992 = vadd.f32 %v820, %v991
  %993 = vmatprep.mubr.bf16.mxu0 0
  %994 = vmatmul.mubr.bf16.gmra.mrb[0].mxu0 %v779
  %v995 = vpop.f32.mrb[0].mxu0
  %v996 = vadd.f32 %v816, %v995
  %v997 = vpop.f32.mrb[0].mxu0
  %v998 = vadd.f32 %v820, %v997
  %v999 = vpop.f32.mrb[0].mxu0
  %v1000 = vadd.f32 %v816, %v999
  %v1001 = vpop.f32.mrb[0].mxu0
  %v1002 = vadd.f32 %v820, %v1001
  %1003 = vmatprep.mubr.bf16.mxu0 0
  %1004 = vmatmul.mubr.bf16.gmra.mrb[0].mxu0 %v780
  %v1005 = vpop.f32.mrb[0].mxu0
  %v1006 = vadd.f32 %v816, %v1005
  %v1007 = vpop.f32.mrb[0].mxu0
  %v1008 = vadd.f32 %v820, %v1007
  %v1009 = vpop.f32.mrb[0].mxu0
  %v1010 = vadd.f32 %v816, %v1009
  %v1011 = vpop.f32.mrb[0].mxu0
  %v1012 = vadd.f32 %v820, %v1011
  %1013 = vmatprep.mubr.bf16.mxu0 0
  %1014 = vmatmul.mubr.bf16.gmra.mrb[0].mxu0 %v781
  %v1015 = vpop.f32.mrb[0].mxu0
  %v1016 = vadd.f32 %v816, %v1015
  %v1017 = vpop.f32.mrb[0].mxu0
  %v1018 = vadd.f32 %v820, %v1017
  %v1019 = vpop.f32.mrb[0].mxu0
  %v1020 = vadd.f32 %v816, %v1019
  %v1021 = vpop.f32.mrb[0].mxu0
  %v1022 = vadd.f32 %v820, %v1021
  %1023 = vmatprep.mubr.bf16.mxu0 0
  %1024 = vmatmul.mubr.bf16.gmra.mrb[0].mxu0 %v782
  %v1025 = vpop.f32.mrb[0].mxu0
  %v1026 = vadd.f32 %v816, %v1025
  %v1027 = vpop.f32.mrb[0].mxu0
  %v1028 = vadd.f32 %v820, %v1027
  %v1029 = vpop.f32.mrb[0].mxu0
  %v1030 = vadd.f32 %v816, %v1029
  %v1031 = vpop.f32.mrb[0].mxu0
  %v1032 = vadd.f32 %v820, %v1031
  %1033 = vmatprep.mubr.bf16.mxu0 0
  %1034 = vmatmul.mubr.bf16.gmra.mrb[0].mxu0 %v783
  %v1035 = vpop.f32.mrb[0].mxu0
  %v1036 = vadd.f32 %v816, %v1035
  %v1037 = vpop.f32.mrb[0].mxu0
  %v1038 = vadd.f32 %v820, %v1037
  %v1039 = vpop.f32.mrb[0].mxu0
  %v1040 = vadd.f32 %v816, %v1039
  %v1041 = vpop.f32.mrb[0].mxu0
  %v1042 = vadd.f32 %v820, %v1041
  %1043 = vmatprep.mubr.bf16.mxu0 0
  %1044 = vmatmul.mubr.bf16.gmra.mrb[0].mxu0 %v784
  %v1045 = vpop.f32.mrb[0].mxu0
  %v1046 = vadd.f32 %v816, %v1045
  %v1047 = vpop.f32.mrb[0].mxu0
  %v1048 = vadd.f32 %v820, %v1047
  %v1049 = vpop.f32.mrb[0].mxu0
  %v1050 = vadd.f32 %v816, %v1049
  %v1051 = vpop.f32.mrb[0].mxu0
  %v1052 = vadd.f32 %v820, %v1051
  %1053 = vmatprep.mubr.bf16.mxu0 0
  %1054 = vmatmul.mubr.bf16.gmra.mrb[0].mxu0 %v785
  %v1055 = vpop.f32.mrb[0].mxu0
  %v1056 = vadd.f32 %v816, %v1055
  %v1057 = vpop.f32.mrb[0].mxu0
  %v1058 = vadd.f32 %v820, %v1057
  %v1059 = vpop.f32.mrb[0].mxu0
  %v1060 = vadd.f32 %v816, %v1059
  %v1061 = vpop.f32.mrb[0].mxu0
  %v1062 = vadd.f32 %v820, %v1061
  %1063 = vdwg.mxu0
  %vm1064 = vcmp.gt.f32.partialorder %v936, 0.0
  %vm1065 = vcmp.gt.f32.partialorder %v938, 0.0
  %vm1066 = vcmp.gt.f32.partialorder %v940, 0.0
  %vm1067 = vcmp.gt.f32.partialorder %v942, 0.0
  %vm1068 = vcmp.gt.f32.partialorder %v946, 0.0
  %vm1069 = vcmp.gt.f32.partialorder %v948, 0.0
  %vm1070 = vcmp.gt.f32.partialorder %v950, 0.0
  %vm1071 = vcmp.gt.f32.partialorder %v952, 0.0
  %vm1072 = vcmp.gt.f32.partialorder %v956, 0.0
  %vm1073 = vcmp.gt.f32.partialorder %v958, 0.0
  %vm1074 = vcmp.gt.f32.partialorder %v960, 0.0
  %vm1075 = vcmp.gt.f32.partialorder %v962, 0.0
  %vm1076 = vcmp.gt.f32.partialorder %v966, 0.0
  %vm1077 = vcmp.gt.f32.partialorder %v968, 0.0
  %vm1078 = vcmp.gt.f32.partialorder %v970, 0.0
  %vm1079 = vcmp.gt.f32.partialorder %v972, 0.0
  %vm1080 = vcmp.gt.f32.partialorder %v976, 0.0
  %vm1081 = vcmp.gt.f32.partialorder %v978, 0.0
  %vm1082 = vcmp.gt.f32.partialorder %v980, 0.0
  %vm1083 = vcmp.gt.f32.partialorder %v982, 0.0
  %vm1084 = vcmp.gt.f32.partialorder %v986, 0.0
  %vm1085 = vcmp.gt.f32.partialorder %v988, 0.0
  %vm1086 = vcmp.gt.f32.partialorder %v990, 0.0
  %vm1087 = vcmp.gt.f32.partialorder %v992, 0.0
  %vm1088 = vcmp.gt.f32.partialorder %v996, 0.0
  %vm1089 = vcmp.gt.f32.partialorder %v998, 0.0
  %vm1090 = vcmp.gt.f32.partialorder %v1000, 0.0
  %vm1091 = vcmp.gt.f32.partialorder %v1002, 0.0
  %vm1092 = vcmp.gt.f32.partialorder %v1006, 0.0
  %vm1093 = vcmp.gt.f32.partialorder %v1008, 0.0
  %vm1094 = vcmp.gt.f32.partialorder %v1010, 0.0
  %vm1095 = vcmp.gt.f32.partialorder %v1012, 0.0
  %vm1096 = vcmp.gt.f32.partialorder %v1016, 0.0
  %vm1097 = vcmp.gt.f32.partialorder %v1018, 0.0
  %vm1098 = vcmp.gt.f32.partialorder %v1020, 0.0
  %vm1099 = vcmp.gt.f32.partialorder %v1022, 0.0
  %vm1100 = vcmp.gt.f32.partialorder %v1026, 0.0
  %vm1101 = vcmp.gt.f32.partialorder %v1028, 0.0
  %vm1102 = vcmp.gt.f32.partialorder %v1030, 0.0
  %vm1103 = vcmp.gt.f32.partialorder %v1032, 0.0
  %vm1104 = vcmp.gt.f32.partialorder %v1036, 0.0
  %vm1105 = vcmp.gt.f32.partialorder %v1038, 0.0
  %vm1106 = vcmp.gt.f32.partialorder %v1040, 0.0
  %vm1107 = vcmp.gt.f32.partialorder %v1042, 0.0
  %vm1108 = vcmp.gt.f32.partialorder %v1046, 0.0
  %vm1109 = vcmp.gt.f32.partialorder %v1048, 0.0
  %vm1110 = vcmp.gt.f32.partialorder %v1050, 0.0
  %vm1111 = vcmp.gt.f32.partialorder %v1052, 0.0
  %vm1112 = vcmp.gt.f32.partialorder %v1056, 0.0
  %vm1113 = vcmp.gt.f32.partialorder %v1058, 0.0
  %vm1114 = vcmp.gt.f32.partialorder %v1060, 0.0
  %vm1115 = vcmp.gt.f32.partialorder %v1062, 0.0
  %v1116 = vmin.f32 %v936, 0.0
  %v1117 = vmin.f32 %v938, 0.0
  %v1118 = vmin.f32 %v940, 0.0
  %v1119 = vmin.f32 %v942, 0.0
  %v1120 = vmin.f32 %v946, 0.0
  %v1121 = vmin.f32 %v948, 0.0
  %v1122 = vmin.f32 %v950, 0.0
  %v1123 = vmin.f32 %v952, 0.0
  %v1124 = vmin.f32 %v956, 0.0
  %v1125 = vmin.f32 %v958, 0.0
  %v1126 = vmin.f32 %v960, 0.0
  %v1127 = vmin.f32 %v962, 0.0
  %v1128 = vmin.f32 %v966, 0.0
  %v1129 = vmin.f32 %v968, 0.0
  %v1130 = vmin.f32 %v970, 0.0
  %v1131 = vmin.f32 %v972, 0.0
  %v1132 = vmin.f32 %v976, 0.0
  %v1133 = vmin.f32 %v978, 0.0
  %v1134 = vmin.f32 %v980, 0.0
  %v1135 = vmin.f32 %v982, 0.0
  %v1136 = vmin.f32 %v986, 0.0
  %v1137 = vmin.f32 %v988, 0.0
  %v1138 = vmin.f32 %v990, 0.0
  %v1139 = vmin.f32 %v992, 0.0
  %v1140 = vmin.f32 %v996, 0.0
  %v1141 = vmin.f32 %v998, 0.0
  %v1142 = vmin.f32 %v1000, 0.0
  %v1143 = vmin.f32 %v1002, 0.0
  %v1144 = vmin.f32 %v1006, 0.0
  %v1145 = vmin.f32 %v1008, 0.0
  %v1146 = vmin.f32 %v1010, 0.0
  %v1147 = vmin.f32 %v1012, 0.0
  %v1148 = vmin.f32 %v1016, 0.0
  %v1149 = vmin.f32 %v1018, 0.0
  %v1150 = vmin.f32 %v1020, 0.0
  %v1151 = vmin.f32 %v1022, 0.0
  %v1152 = vmin.f32 %v1026, 0.0
  %v1153 = vmin.f32 %v1028, 0.0
  %v1154 = vmin.f32 %v1030, 0.0
  %v1155 = vmin.f32 %v1032, 0.0
  %v1156 = vmin.f32 %v1036, 0.0
  %v1157 = vmin.f32 %v1038, 0.0
  %v1158 = vmin.f32 %v1040, 0.0
  %v1159 = vmin.f32 %v1042, 0.0
  %v1160 = vmin.f32 %v1046, 0.0
  %v1161 = vmin.f32 %v1048, 0.0
  %v1162 = vmin.f32 %v1050, 0.0
  %v1163 = vmin.f32 %v1052, 0.0
  %v1164 = vmin.f32 %v1056, 0.0
  %v1165 = vmin.f32 %v1058, 0.0
  %v1166 = vmin.f32 %v1060, 0.0
  %v1167 = vmin.f32 %v1062, 0.0
  %v1168 = vmul.f32 %v1116, 1.442695
  %v1169 = vpow.pop %v1168
  %v1170 = vmul.f32 %v1117, 1.442695
  %v1171 = vpow.pop %v1170
  %v1172 = vmul.f32 %v1118, 1.442695
  %v1173 = vpow.pop %v1172
  %v1174 = vmul.f32 %v1119, 1.442695
  %v1175 = vpow.pop %v1174
  %v1176 = vmul.f32 %v1120, 1.442695
  %v1177 = vpow.pop %v1176
  %v1178 = vmul.f32 %v1121, 1.442695
  %v1179 = vpow.pop %v1178
  %v1180 = vmul.f32 %v1122, 1.442695
  %v1181 = vpow.pop %v1180
  %v1182 = vmul.f32 %v1123, 1.442695
  %v1183 = vpow.pop %v1182
  %v1184 = vmul.f32 %v1124, 1.442695
  %v1185 = vpow.pop %v1184
  %v1186 = vmul.f32 %v1125, 1.442695
  %v1187 = vpow.pop %v1186
  %v1188 = vmul.f32 %v1126, 1.442695
  %v1189 = vpow.pop %v1188
  %v1190 = vmul.f32 %v1127, 1.442695
  %v1191 = vpow.pop %v1190
  %v1192 = vmul.f32 %v1128, 1.442695
  %v1193 = vpow.pop %v1192
  %v1194 = vmul.f32 %v1129, 1.442695
  %v1195 = vpow.pop %v1194
  %v1196 = vmul.f32 %v1130, 1.442695
  %v1197 = vpow.pop %v1196
  %v1198 = vmul.f32 %v1131, 1.442695
  %v1199 = vpow.pop %v1198
  %v1200 = vmul.f32 %v1132, 1.442695
  %v1201 = vpow.pop %v1200
  %v1202 = vmul.f32 %v1133, 1.442695
  %v1203 = vpow.pop %v1202
  %v1204 = vmul.f32 %v1134, 1.442695
  %v1205 = vpow.pop %v1204
  %v1206 = vmul.f32 %v1135, 1.442695
  %v1207 = vpow.pop %v1206
  %v1208 = vmul.f32 %v1136, 1.442695
  %v1209 = vpow.pop %v1208
  %v1210 = vmul.f32 %v1137, 1.442695
  %v1211 = vpow.pop %v1210
  %v1212 = vmul.f32 %v1138, 1.442695
  %v1213 = vpow.pop %v1212
  %v1214 = vmul.f32 %v1139, 1.442695
  %v1215 = vpow.pop %v1214
  %v1216 = vmul.f32 %v1140, 1.442695
  %v1217 = vpow.pop %v1216
  %v1218 = vmul.f32 %v1141, 1.442695
  %v1219 = vpow.pop %v1218
  %v1220 = vmul.f32 %v1142, 1.442695
  %v1221 = vpow.pop %v1220
  %v1222 = vmul.f32 %v1143, 1.442695
  %v1223 = vpow.pop %v1222
  %v1224 = vmul.f32 %v1144, 1.442695
  %v1225 = vpow.pop %v1224
  %v1226 = vmul.f32 %v1145, 1.442695
  %v1227 = vpow.pop %v1226
  %v1228 = vmul.f32 %v1146, 1.442695
  %v1229 = vpow.pop %v1228
  %v1230 = vmul.f32 %v1147, 1.442695
  %v1231 = vpow.pop %v1230
  %v1232 = vmul.f32 %v1148, 1.442695
  %v1233 = vpow.pop %v1232
  %v1234 = vmul.f32 %v1149, 1.442695
  %v1235 = vpow.pop %v1234
  %v1236 = vmul.f32 %v1150, 1.442695
  %v1237 = vpow.pop %v1236
  %v1238 = vmul.f32 %v1151, 1.442695
  %v1239 = vpow.pop %v1238
  %v1240 = vmul.f32 %v1152, 1.442695
  %v1241 = vpow.pop %v1240
  %v1242 = vmul.f32 %v1153, 1.442695
  %v1243 = vpow.pop %v1242
  %v1244 = vmul.f32 %v1154, 1.442695
  %v1245 = vpow.pop %v1244
  %v1246 = vmul.f32 %v1155, 1.442695
  %v1247 = vpow.pop %v1246
  %v1248 = vmul.f32 %v1156, 1.442695
  %v1249 = vpow.pop %v1248
  %v1250 = vmul.f32 %v1157, 1.442695
  %v1251 = vpow.pop %v1250
  %v1252 = vmul.f32 %v1158, 1.442695
  %v1253 = vpow.pop %v1252
  %v1254 = vmul.f32 %v1159, 1.442695
  %v1255 = vpow.pop %v1254
  %v1256 = vmul.f32 %v1160, 1.442695
  %v1257 = vpow.pop %v1256
  %v1258 = vmul.f32 %v1161, 1.442695
  %v1259 = vpow.pop %v1258
  %v1260 = vmul.f32 %v1162, 1.442695
  %v1261 = vpow.pop %v1260
  %v1262 = vmul.f32 %v1163, 1.442695
  %v1263 = vpow.pop %v1262
  %v1264 = vmul.f32 %v1164, 1.442695
  %v1265 = vpow.pop %v1264
  %v1266 = vmul.f32 %v1165, 1.442695
  %v1267 = vpow.pop %v1266
  %v1268 = vmul.f32 %v1166, 1.442695
  %v1269 = vpow.pop %v1268
  %v1270 = vmul.f32 %v1167, 1.442695
  %v1271 = vpow.pop %v1270
  %v1272 = vsub.f32 %v1169, 1.0
  %v1273 = vsub.f32 %v1171, 1.0
  %v1274 = vsub.f32 %v1173, 1.0
  %v1275 = vsub.f32 %v1175, 1.0
  %v1276 = vsub.f32 %v1177, 1.0
  %v1277 = vsub.f32 %v1179, 1.0
  %v1278 = vsub.f32 %v1181, 1.0
  %v1279 = vsub.f32 %v1183, 1.0
  %v1280 = vsub.f32 %v1185, 1.0
  %v1281 = vsub.f32 %v1187, 1.0
  %v1282 = vsub.f32 %v1189, 1.0
  %v1283 = vsub.f32 %v1191, 1.0
  %v1284 = vsub.f32 %v1193, 1.0
  %v1285 = vsub.f32 %v1195, 1.0
  %v1286 = vsub.f32 %v1197, 1.0
  %v1287 = vsub.f32 %v1199, 1.0
  %v1288 = vsub.f32 %v1201, 1.0
  %v1289 = vsub.f32 %v1203, 1.0
  %v1290 = vsub.f32 %v1205, 1.0
  %v1291 = vsub.f32 %v1207, 1.0
  %v1292 = vsub.f32 %v1209, 1.0
  %v1293 = vsub.f32 %v1211, 1.0
  %v1294 = vsub.f32 %v1213, 1.0
  %v1295 = vsub.f32 %v1215, 1.0
  %v1296 = vsub.f32 %v1217, 1.0
  %v1297 = vsub.f32 %v1219, 1.0
  %v1298 = vsub.f32 %v1221, 1.0
  %v1299 = vsub.f32 %v1223, 1.0
  %v1300 = vsub.f32 %v1225, 1.0
  %v1301 = vsub.f32 %v1227, 1.0
  %v1302 = vsub.f32 %v1229, 1.0
  %v1303 = vsub.f32 %v1231, 1.0
  %v1304 = vsub.f32 %v1233, 1.0
  %v1305 = vsub.f32 %v1235, 1.0
  %v1306 = vsub.f32 %v1237, 1.0
  %v1307 = vsub.f32 %v1239, 1.0
  %v1308 = vsub.f32 %v1241, 1.0
  %v1309 = vsub.f32 %v1243, 1.0
  %v1310 = vsub.f32 %v1245, 1.0
  %v1311 = vsub.f32 %v1247, 1.0
  %v1312 = vsub.f32 %v1249, 1.0
  %v1313 = vsub.f32 %v1251, 1.0
  %v1314 = vsub.f32 %v1253, 1.0
  %v1315 = vsub.f32 %v1255, 1.0
  %v1316 = vsub.f32 %v1257, 1.0
  %v1317 = vsub.f32 %v1259, 1.0
  %v1318 = vsub.f32 %v1261, 1.0
  %v1319 = vsub.f32 %v1263, 1.0
  %v1320 = vsub.f32 %v1265, 1.0
  %v1321 = vsub.f32 %v1267, 1.0
  %v1322 = vsub.f32 %v1269, 1.0
  %v1323 = vsub.f32 %v1271, 1.0
  %v1324 = vsel %vm1064, %v936, %v1272
  %v1325 = vsel %vm1065, %v938, %v1273
  %v1326 = vsel %vm1066, %v940, %v1274
  %v1327 = vsel %vm1067, %v942, %v1275
  %v1328 = vsel %vm1068, %v946, %v1276
  %v1329 = vsel %vm1069, %v948, %v1277
  %v1330 = vsel %vm1070, %v950, %v1278
  %v1331 = vsel %vm1071, %v952, %v1279
  %v1332 = vsel %vm1072, %v956, %v1280
  %v1333 = vsel %vm1073, %v958, %v1281
  %v1334 = vsel %vm1074, %v960, %v1282
  %v1335 = vsel %vm1075, %v962, %v1283
  %v1336 = vsel %vm1076, %v966, %v1284
  %v1337 = vsel %vm1077, %v968, %v1285
  %v1338 = vsel %vm1078, %v970, %v1286
  %v1339 = vsel %vm1079, %v972, %v1287
  %v1340 = vsel %vm1080, %v976, %v1288
  %v1341 = vsel %vm1081, %v978, %v1289
  %v1342 = vsel %vm1082, %v980, %v1290
  %v1343 = vsel %vm1083, %v982, %v1291
  %v1344 = vsel %vm1084, %v986, %v1292
  %v1345 = vsel %vm1085, %v988, %v1293
  %v1346 = vsel %vm1086, %v990, %v1294
  %v1347 = vsel %vm1087, %v992, %v1295
  %v1348 = vsel %vm1088, %v996, %v1296
  %v1349 = vsel %vm1089, %v998, %v1297
  %v1350 = vsel %vm1090, %v1000, %v1298
  %v1351 = vsel %vm1091, %v1002, %v1299
  %v1352 = vsel %vm1092, %v1006, %v1300
  %v1353 = vsel %vm1093, %v1008, %v1301
  %v1354 = vsel %vm1094, %v1010, %v1302
  %v1355 = vsel %vm1095, %v1012, %v1303
  %v1356 = vsel %vm1096, %v1016, %v1304
  %v1357 = vsel %vm1097, %v1018, %v1305
  %v1358 = vsel %vm1098, %v1020, %v1306
  %v1359 = vsel %vm1099, %v1022, %v1307
  %v1360 = vsel %vm1100, %v1026, %v1308
  %v1361 = vsel %vm1101, %v1028, %v1309
  %v1362 = vsel %vm1102, %v1030, %v1310
  %v1363 = vsel %vm1103, %v1032, %v1311
  %v1364 = vsel %vm1104, %v1036, %v1312
  %v1365 = vsel %vm1105, %v1038, %v1313
  %v1366 = vsel %vm1106, %v1040, %v1314
  %v1367 = vsel %vm1107, %v1042, %v1315
  %v1368 = vsel %vm1108, %v1046, %v1316
  %v1369 = vsel %vm1109, %v1048, %v1317
  %v1370 = vsel %vm1110, %v1050, %v1318
  %v1371 = vsel %vm1111, %v1052, %v1319
  %v1372 = vsel %vm1112, %v1056, %v1320
  %v1373 = vsel %vm1113, %v1058, %v1321
  %v1374 = vsel %vm1114, %v1060, %v1322
  %v1375 = vsel %vm1115, %v1062, %v1323
  %v1376 = vpack.c.bf16 %v1326, %v1324
  %v1377 = vpack.c.bf16 %v1327, %v1325
  %v1378 = vpack.c.bf16 %v1330, %v1328
  %v1379 = vpack.c.bf16 %v1331, %v1329
  %v1380 = vpack.c.bf16 %v1334, %v1332
  %v1381 = vpack.c.bf16 %v1335, %v1333
  %v1382 = vpack.c.bf16 %v1338, %v1336
  %v1383 = vpack.c.bf16 %v1339, %v1337
  %v1384 = vpack.c.bf16 %v1342, %v1340
  %v1385 = vpack.c.bf16 %v1343, %v1341
  %v1386 = vpack.c.bf16 %v1346, %v1344
  %v1387 = vpack.c.bf16 %v1347, %v1345
  %v1388 = vpack.c.bf16 %v1350, %v1348
  %v1389 = vpack.c.bf16 %v1351, %v1349
  %v1390 = vpack.c.bf16 %v1354, %v1352
  %v1391 = vpack.c.bf16 %v1355, %v1353
  %v1392 = vpack.c.bf16 %v1358, %v1356
  %v1393 = vpack.c.bf16 %v1359, %v1357
  %v1394 = vpack.c.bf16 %v1362, %v1360
  %v1395 = vpack.c.bf16 %v1363, %v1361
  %v1396 = vpack.c.bf16 %v1366, %v1364
  %v1397 = vpack.c.bf16 %v1367, %v1365
  %v1398 = vpack.c.bf16 %v1370, %v1368
  %v1399 = vpack.c.bf16 %v1371, %v1369
  %v1400 = vpack.c.bf16 %v1374, %v1372
  %v1401 = vpack.c.bf16 %v1375, %v1373
  %v1402 = vld [vmem:[%s4] sm:$0xf]
  %v1403 = vld [vmem:[%s4 + $0x4] sm:$0xf]
  %v1404 = vld [vmem:[%s4 + $0x8] sm:$0xf]
  %v1405 = vld [vmem:[%s4 + $0xc] sm:$0xf]
  %v1406 = vld [vmem:[%s4 + $0x10] sm:$0xf]
  %v1407 = vld [vmem:[%s4 + $0x14] sm:$0xf]
  %v1408 = vld [vmem:[%s4 + $0x18] sm:$0xf]
  %v1409 = vld [vmem:[%s4 + $0x1c] sm:$0xf]
  %v1410 = vld [vmem:[%s4 + $0x20] sm:$0xf]
  %v1411 = vld [vmem:[%s4 + $0x24] sm:$0xf]
  %v1412 = vld [vmem:[%s4 + $0x28] sm:$0xf]
  %v1413 = vld [vmem:[%s4 + $0x2c] sm:$0xf]
  %v1414 = vld [vmem:[%s4 + $0x30] sm:$0xf]
  %v1415 = vld [vmem:[%s4 + $0x34] sm:$0xf]
  %v1416 = vld [vmem:[%s4 + $0x38] sm:$0xf]
  %v1417 = vld [vmem:[%s4 + $0x3c] sm:$0xf]
  %v1418 = vld [vmem:[%s4 + $0x40] sm:$0xf]
  %v1419 = vld [vmem:[%s4 + $0x44] sm:$0xf]
  %v1420 = vld [vmem:[%s4 + $0x48] sm:$0xf]
  %v1421 = vld [vmem:[%s4 + $0x4c] sm:$0xf]
  %v1422 = vld [vmem:[%s4 + $0x50] sm:$0xf]
  %v1423 = vld [vmem:[%s4 + $0x54] sm:$0xf]
  %v1424 = vld [vmem:[%s4 + $0x58] sm:$0xf]
  %v1425 = vld [vmem:[%s4 + $0x5c] sm:$0xf]
  %v1426 = vld [vmem:[%s4 + $0x60] sm:$0xf]
  %v1427 = vld [vmem:[%s4 + $0x64] sm:$0xf]
  %v1428 = vld [vmem:[%s4 + $0x68] sm:$0xf]
  %v1429 = vld [vmem:[%s4 + $0x6c] sm:$0xf]
  %v1430 = vld [vmem:[%s4 + $0x70] sm:$0xf]
  %v1431 = vld [vmem:[%s4 + $0x74] sm:$0xf]
  %v1432 = vld [vmem:[%s4 + $0x78] sm:$0xf]
  %v1433 = vld [vmem:[%s4 + $0x7c] sm:$0xf]
  %v1434 = vlaneseq
  %v1435 = vshrl.u32 %v1434, 7
  %v1436 = vsub.s32 1, %v1435
  %v1437 = vrot.slane %v80, %v1436
  %v1470 = vunpack.c.l.b16 %v1402
  %v1471 = vunpack.c.l.b16 %v1403
  %v1472 = vunpack.c.l.b16 %v1404
  %v1473 = vunpack.c.l.b16 %v1405
  %v1474 = vunpack.c.l.b16 %v1406
  %v1475 = vunpack.c.l.b16 %v1407
  %v1476 = vunpack.c.l.b16 %v1408
  %v1477 = vunpack.c.l.b16 %v1409
  %v1478 = vunpack.c.l.b16 %v1410
  %v1479 = vunpack.c.l.b16 %v1411
  %v1480 = vunpack.c.l.b16 %v1412
  %v1481 = vunpack.c.l.b16 %v1413
  %v1482 = vunpack.c.l.b16 %v1414
  %v1483 = vunpack.c.l.b16 %v1415
  %v1484 = vunpack.c.l.b16 %v1416
  %v1485 = vunpack.c.l.b16 %v1417
  %v1486 = vunpack.c.l.b16 %v1418
  %v1487 = vunpack.c.l.b16 %v1419
  %v1488 = vunpack.c.l.b16 %v1420
  %v1489 = vunpack.c.l.b16 %v1421
  %v1490 = vunpack.c.l.b16 %v1422
  %v1491 = vunpack.c.l.b16 %v1423
  %v1492 = vunpack.c.l.b16 %v1424
  %v1493 = vunpack.c.l.b16 %v1425
  %v1494 = vunpack.c.l.b16 %v1426
  %v1495 = vunpack.c.l.b16 %v1427
  %v1496 = vunpack.c.l.b16 %v1428
  %v1497 = vunpack.c.l.b16 %v1429
  %v1498 = vunpack.c.l.b16 %v1430
  %v1499 = vunpack.c.l.b16 %v1431
  %v1500 = vunpack.c.l.b16 %v1432
  %v1501 = vunpack.c.l.b16 %v1433
  %v1502 = vpack.c.b16 %v1471, %v1470
  %v1503 = vpack.c.b16 %v1473, %v1472
  %v1504 = vpack.c.b16 %v1475, %v1474
  %v1505 = vpack.c.b16 %v1477, %v1476
  %v1506 = vpack.c.b16 %v1479, %v1478
  %v1507 = vpack.c.b16 %v1481, %v1480
  %v1508 = vpack.c.b16 %v1483, %v1482
  %v1509 = vpack.c.b16 %v1485, %v1484
  %v1510 = vpack.c.b16 %v1487, %v1486
  %v1511 = vpack.c.b16 %v1489, %v1488
  %v1512 = vpack.c.b16 %v1491, %v1490
  %v1513 = vpack.c.b16 %v1493, %v1492
  %v1514 = vpack.c.b16 %v1495, %v1494
  %v1515 = vpack.c.b16 %v1497, %v1496
  %v1516 = vpack.c.b16 %v1499, %v1498
  %v1517 = vpack.c.b16 %v1501, %v1500
  %1534 = vmatprep.subr.bf16.mxu0 0
  %1535 = vmatpush1.bf16.msra.mxu0 %v1502
  %1536 = vmatprep.subr.bf16.mxu0 0
  %1537 = vmatpush1.bf16.msra.mxu0 %v1503
  %1538 = vmatprep.subr.bf16.mxu0 0
  %1539 = vmatpush1.bf16.msra.mxu0 %v1504
  %1540 = vmatprep.subr.bf16.mxu0 0
  %1541 = vmatpush1.bf16.msra.mxu0 %v1505
  %1542 = vmatprep.subr.bf16.mxu0 0
  %1543 = vmatpush1.bf16.msra.mxu0 %v1506
  %1544 = vmatprep.subr.bf16.mxu0 0
  %1545 = vmatpush1.bf16.msra.mxu0 %v1507
  %1546 = vmatprep.subr.bf16.mxu0 0
  %1547 = vmatpush1.bf16.msra.mxu0 %v1508
  %1548 = vmatprep.subr.bf16.mxu0 0
  %1549 = vmatpush1.bf16.msra.mxu0 %v1509
  %1550 = vmatprep.subr.bf16.mxu0 0
  %1551 = vmatpush1.bf16.msra.mxu0 %v1510
  %1552 = vmatprep.subr.bf16.mxu0 0
  %1553 = vmatpush1.bf16.msra.mxu0 %v1511
  %1554 = vmatprep.subr.bf16.mxu0 0
  %1555 = vmatpush1.bf16.msra.mxu0 %v1512
  %1556 = vmatprep.subr.bf16.mxu0 0
  %1557 = vmatpush1.bf16.msra.mxu0 %v1513
  %1558 = vmatprep.subr.bf16.mxu0 0
  %1559 = vmatpush1.bf16.msra.mxu0 %v1514
  %1560 = vmatprep.subr.bf16.mxu0 0
  %1561 = vmatpush1.bf16.msra.mxu0 %v1515
  %1562 = vmatprep.subr.bf16.mxu0 0
  %1563 = vmatpush1.bf16.msra.mxu0 %v1516
  %1564 = vmatprep.subr.bf16.mxu0 0
  %1565 = vmatpush1.bf16.msra.mxu0 %v1517
  %1566 = vmatprep.mubr.bf16.mxu0 %v1377
  %1567 = vmatmul.mubr.bf16.gmra.mrb[0].mxu0 %v1376
  %v1568 = vpop.f32.mrb[0].mxu0
  %v1569 = vadd.f32 %v1437, %v1568
  %v1570 = vpop.f32.mrb[0].mxu0
  %v1571 = vpop.f32.mrb[0].mxu0
  %v1572 = vadd.f32 %v1437, %v1571
  %v1573 = vpop.f32.mrb[0].mxu0
  %1574 = vmatprep.mubr.bf16.mxu0 %v1379
  %1575 = vmatmul.mubr.bf16.gmra.mrb[0].mxu0 %v1378
  %v1576 = vpop.f32.mrb[0].mxu0
  %v1577 = vadd.f32 %v1437, %v1576
  %v1578 = vpop.f32.mrb[0].mxu0
  %v1579 = vpop.f32.mrb[0].mxu0
  %v1580 = vadd.f32 %v1437, %v1579
  %v1581 = vpop.f32.mrb[0].mxu0
  %1582 = vmatprep.mubr.bf16.mxu0 %v1381
  %1583 = vmatmul.mubr.bf16.gmra.mrb[0].mxu0 %v1380
  %v1584 = vpop.f32.mrb[0].mxu0
  %v1585 = vadd.f32 %v1437, %v1584
  %v1586 = vpop.f32.mrb[0].mxu0
  %v1587 = vpop.f32.mrb[0].mxu0
  %v1588 = vadd.f32 %v1437, %v1587
  %v1589 = vpop.f32.mrb[0].mxu0
  %1590 = vmatprep.mubr.bf16.mxu0 %v1383
  %1591 = vmatmul.mubr.bf16.gmra.mrb[0].mxu0 %v1382
  %v1592 = vpop.f32.mrb[0].mxu0
  %v1593 = vadd.f32 %v1437, %v1592
  %v1594 = vpop.f32.mrb[0].mxu0
  %v1595 = vpop.f32.mrb[0].mxu0
  %v1596 = vadd.f32 %v1437, %v1595
  %v1597 = vpop.f32.mrb[0].mxu0
  %1598 = vmatprep.mubr.bf16.mxu0 %v1385
  %1599 = vmatmul.mubr.bf16.gmra.mrb[0].mxu0 %v1384
  %v1600 = vpop.f32.mrb[0].mxu0
  %v1601 = vadd.f32 %v1437, %v1600
  %v1602 = vpop.f32.mrb[0].mxu0
  %v1603 = vpop.f32.mrb[0].mxu0
  %v1604 = vadd.f32 %v1437, %v1603
  %v1605 = vpop.f32.mrb[0].mxu0
  %1606 = vmatprep.mubr.bf16.mxu0 %v1387
  %1607 = vmatmul.mubr.bf16.gmra.mrb[0].mxu0 %v1386
  %v1608 = vpop.f32.mrb[0].mxu0
  %v1609 = vadd.f32 %v1437, %v1608
  %v1610 = vpop.f32.mrb[0].mxu0
  %v1611 = vpop.f32.mrb[0].mxu0
  %v1612 = vadd.f32 %v1437, %v1611
  %v1613 = vpop.f32.mrb[0].mxu0
  %1614 = vmatprep.mubr.bf16.mxu0 %v1389
  %1615 = vmatmul.mubr.bf16.gmra.mrb[0].mxu0 %v1388
  %v1616 = vpop.f32.mrb[0].mxu0
  %v1617 = vadd.f32 %v1437, %v1616
  %v1618 = vpop.f32.mrb[0].mxu0
  %v1619 = vpop.f32.mrb[0].mxu0
  %v1620 = vadd.f32 %v1437, %v1619
  %v1621 = vpop.f32.mrb[0].mxu0
  %1622 = vmatprep.mubr.bf16.mxu0 %v1391
  %1623 = vmatmul.mubr.bf16.gmra.mrb[0].mxu0 %v1390
  %v1624 = vpop.f32.mrb[0].mxu0
  %v1625 = vadd.f32 %v1437, %v1624
  %v1626 = vpop.f32.mrb[0].mxu0
  %v1627 = vpop.f32.mrb[0].mxu0
  %v1628 = vadd.f32 %v1437, %v1627
  %v1629 = vpop.f32.mrb[0].mxu0
  %1630 = vmatprep.mubr.bf16.mxu0 %v1393
  %1631 = vmatmul.mubr.bf16.gmra.mrb[0].mxu0 %v1392
  %v1632 = vpop.f32.mrb[0].mxu0
  %v1633 = vadd.f32 %v1437, %v1632
  %v1634 = vpop.f32.mrb[0].mxu0
  %v1635 = vpop.f32.mrb[0].mxu0
  %v1636 = vadd.f32 %v1437, %v1635
  %v1637 = vpop.f32.mrb[0].mxu0
  %1638 = vmatprep.mubr.bf16.mxu0 %v1395
  %1639 = vmatmul.mubr.bf16.gmra.mrb[0].mxu0 %v1394
  %v1640 = vpop.f32.mrb[0].mxu0
  %v1641 = vadd.f32 %v1437, %v1640
  %v1642 = vpop.f32.mrb[0].mxu0
  %v1643 = vpop.f32.mrb[0].mxu0
  %v1644 = vadd.f32 %v1437, %v1643
  %v1645 = vpop.f32.mrb[0].mxu0
  %1646 = vmatprep.mubr.bf16.mxu0 %v1397
  %1647 = vmatmul.mubr.bf16.gmra.mrb[0].mxu0 %v1396
  %v1648 = vpop.f32.mrb[0].mxu0
  %v1649 = vadd.f32 %v1437, %v1648
  %v1650 = vpop.f32.mrb[0].mxu0
  %v1651 = vpop.f32.mrb[0].mxu0
  %v1652 = vadd.f32 %v1437, %v1651
  %v1653 = vpop.f32.mrb[0].mxu0
  %1654 = vmatprep.mubr.bf16.mxu0 %v1399
  %1655 = vmatmul.mubr.bf16.gmra.mrb[0].mxu0 %v1398
  %v1656 = vpop.f32.mrb[0].mxu0
  %v1657 = vadd.f32 %v1437, %v1656
  %v1658 = vpop.f32.mrb[0].mxu0
  %v1659 = vpop.f32.mrb[0].mxu0
  %v1660 = vadd.f32 %v1437, %v1659
  %v1661 = vpop.f32.mrb[0].mxu0
  %1662 = vmatprep.mubr.bf16.mxu0 %v1401
  %1663 = vmatmul.mubr.bf16.gmra.mrb[0].mxu0 %v1400
  %v1664 = vpop.f32.mrb[0].mxu0
  %v1665 = vadd.f32 %v1437, %v1664
  %v1666 = vpop.f32.mrb[0].mxu0
  %v1667 = vpop.f32.mrb[0].mxu0
  %v1668 = vadd.f32 %v1437, %v1667
  %v1669 = vpop.f32.mrb[0].mxu0
  %1670 = vdwg.mxu0
  %vm1671 = vcmp.gt.f32.partialorder %v1569, 0.0
  %vm1672 = vcmp.gt.f32.partialorder %v1572, 0.0
  %vm1673 = vcmp.gt.f32.partialorder %v1577, 0.0
  %vm1674 = vcmp.gt.f32.partialorder %v1580, 0.0
  %vm1675 = vcmp.gt.f32.partialorder %v1585, 0.0
  %vm1676 = vcmp.gt.f32.partialorder %v1588, 0.0
  %vm1677 = vcmp.gt.f32.partialorder %v1593, 0.0
  %vm1678 = vcmp.gt.f32.partialorder %v1596, 0.0
  %vm1679 = vcmp.gt.f32.partialorder %v1601, 0.0
  %vm1680 = vcmp.gt.f32.partialorder %v1604, 0.0
  %vm1681 = vcmp.gt.f32.partialorder %v1609, 0.0
  %vm1682 = vcmp.gt.f32.partialorder %v1612, 0.0
  %vm1683 = vcmp.gt.f32.partialorder %v1617, 0.0
  %vm1684 = vcmp.gt.f32.partialorder %v1620, 0.0
  %vm1685 = vcmp.gt.f32.partialorder %v1625, 0.0
  %vm1686 = vcmp.gt.f32.partialorder %v1628, 0.0
  %vm1687 = vcmp.gt.f32.partialorder %v1633, 0.0
  %vm1688 = vcmp.gt.f32.partialorder %v1636, 0.0
  %vm1689 = vcmp.gt.f32.partialorder %v1641, 0.0
  %vm1690 = vcmp.gt.f32.partialorder %v1644, 0.0
  %vm1691 = vcmp.gt.f32.partialorder %v1649, 0.0
  %vm1692 = vcmp.gt.f32.partialorder %v1652, 0.0
  %vm1693 = vcmp.gt.f32.partialorder %v1657, 0.0
  %vm1694 = vcmp.gt.f32.partialorder %v1660, 0.0
  %vm1695 = vcmp.gt.f32.partialorder %v1665, 0.0
  %vm1696 = vcmp.gt.f32.partialorder %v1668, 0.0
  %v1697 = vmin.f32 %v1569, 0.0
  %v1698 = vmin.f32 %v1572, 0.0
  %v1699 = vmin.f32 %v1577, 0.0
  %v1700 = vmin.f32 %v1580, 0.0
  %v1701 = vmin.f32 %v1585, 0.0
  %v1702 = vmin.f32 %v1588, 0.0
  %v1703 = vmin.f32 %v1593, 0.0
  %v1704 = vmin.f32 %v1596, 0.0
  %v1705 = vmin.f32 %v1601, 0.0
  %v1706 = vmin.f32 %v1604, 0.0
  %v1707 = vmin.f32 %v1609, 0.0
  %v1708 = vmin.f32 %v1612, 0.0
  %v1709 = vmin.f32 %v1617, 0.0
  %v1710 = vmin.f32 %v1620, 0.0
  %v1711 = vmin.f32 %v1625, 0.0
  %v1712 = vmin.f32 %v1628, 0.0
  %v1713 = vmin.f32 %v1633, 0.0
  %v1714 = vmin.f32 %v1636, 0.0
  %v1715 = vmin.f32 %v1641, 0.0
  %v1716 = vmin.f32 %v1644, 0.0
  %v1717 = vmin.f32 %v1649, 0.0
  %v1718 = vmin.f32 %v1652, 0.0
  %v1719 = vmin.f32 %v1657, 0.0
  %v1720 = vmin.f32 %v1660, 0.0
  %v1721 = vmin.f32 %v1665, 0.0
  %v1722 = vmin.f32 %v1668, 0.0
  %v1723 = vmul.f32 %v1697, 1.442695
  %v1724 = vpow.pop %v1723
  %v1725 = vmul.f32 %v1698, 1.442695
  %v1726 = vpow.pop %v1725
  %v1727 = vmul.f32 %v1699, 1.442695
  %v1728 = vpow.pop %v1727
  %v1729 = vmul.f32 %v1700, 1.442695
  %v1730 = vpow.pop %v1729
  %v1731 = vmul.f32 %v1701, 1.442695
  %v1732 = vpow.pop %v1731
  %v1733 = vmul.f32 %v1702, 1.442695
  %v1734 = vpow.pop %v1733
  %v1735 = vmul.f32 %v1703, 1.442695
  %v1736 = vpow.pop %v1735
  %v1737 = vmul.f32 %v1704, 1.442695
  %v1738 = vpow.pop %v1737
  %v1739 = vmul.f32 %v1705, 1.442695
  %v1740 = vpow.pop %v1739
  %v1741 = vmul.f32 %v1706, 1.442695
  %v1742 = vpow.pop %v1741
  %v1743 = vmul.f32 %v1707, 1.442695
  %v1744 = vpow.pop %v1743
  %v1745 = vmul.f32 %v1708, 1.442695
  %v1746 = vpow.pop %v1745
  %v1747 = vmul.f32 %v1709, 1.442695
  %v1748 = vpow.pop %v1747
  %v1749 = vmul.f32 %v1710, 1.442695
  %v1750 = vpow.pop %v1749
  %v1751 = vmul.f32 %v1711, 1.442695
  %v1752 = vpow.pop %v1751
  %v1753 = vmul.f32 %v1712, 1.442695
  %v1754 = vpow.pop %v1753
  %v1755 = vmul.f32 %v1713, 1.442695
  %v1756 = vpow.pop %v1755
  %v1757 = vmul.f32 %v1714, 1.442695
  %v1758 = vpow.pop %v1757
  %v1759 = vmul.f32 %v1715, 1.442695
  %v1760 = vpow.pop %v1759
  %v1761 = vmul.f32 %v1716, 1.442695
  %v1762 = vpow.pop %v1761
  %v1763 = vmul.f32 %v1717, 1.442695
  %v1764 = vpow.pop %v1763
  %v1765 = vmul.f32 %v1718, 1.442695
  %v1766 = vpow.pop %v1765
  %v1767 = vmul.f32 %v1719, 1.442695
  %v1768 = vpow.pop %v1767
  %v1769 = vmul.f32 %v1720, 1.442695
  %v1770 = vpow.pop %v1769
  %v1771 = vmul.f32 %v1721, 1.442695
  %v1772 = vpow.pop %v1771
  %v1773 = vmul.f32 %v1722, 1.442695
  %v1774 = vpow.pop %v1773
  %v1775 = vsub.f32 %v1724, 1.0
  %v1776 = vsub.f32 %v1726, 1.0
  %v1777 = vsub.f32 %v1728, 1.0
  %v1778 = vsub.f32 %v1730, 1.0
  %v1779 = vsub.f32 %v1732, 1.0
  %v1780 = vsub.f32 %v1734, 1.0
  %v1781 = vsub.f32 %v1736, 1.0
  %v1782 = vsub.f32 %v1738, 1.0
  %v1783 = vsub.f32 %v1740, 1.0
  %v1784 = vsub.f32 %v1742, 1.0
  %v1785 = vsub.f32 %v1744, 1.0
  %v1786 = vsub.f32 %v1746, 1.0
  %v1787 = vsub.f32 %v1748, 1.0
  %v1788 = vsub.f32 %v1750, 1.0
  %v1789 = vsub.f32 %v1752, 1.0
  %v1790 = vsub.f32 %v1754, 1.0
  %v1791 = vsub.f32 %v1756, 1.0
  %v1792 = vsub.f32 %v1758, 1.0
  %v1793 = vsub.f32 %v1760, 1.0
  %v1794 = vsub.f32 %v1762, 1.0
  %v1795 = vsub.f32 %v1764, 1.0
  %v1796 = vsub.f32 %v1766, 1.0
  %v1797 = vsub.f32 %v1768, 1.0
  %v1798 = vsub.f32 %v1770, 1.0
  %v1799 = vsub.f32 %v1772, 1.0
  %v1800 = vsub.f32 %v1774, 1.0
  %v1801 = vsel %vm1671, %v1569, %v1775
  %v1802 = vsel %vm1672, %v1572, %v1776
  %v1803 = vsel %vm1673, %v1577, %v1777
  %v1804 = vsel %vm1674, %v1580, %v1778
  %v1805 = vsel %vm1675, %v1585, %v1779
  %v1806 = vsel %vm1676, %v1588, %v1780
  %v1807 = vsel %vm1677, %v1593, %v1781
  %v1808 = vsel %vm1678, %v1596, %v1782
  %v1809 = vsel %vm1679, %v1601, %v1783
  %v1810 = vsel %vm1680, %v1604, %v1784
  %v1811 = vsel %vm1681, %v1609, %v1785
  %v1812 = vsel %vm1682, %v1612, %v1786
  %v1813 = vsel %vm1683, %v1617, %v1787
  %v1814 = vsel %vm1684, %v1620, %v1788
  %v1815 = vsel %vm1685, %v1625, %v1789
  %v1816 = vsel %vm1686, %v1628, %v1790
  %v1817 = vsel %vm1687, %v1633, %v1791
  %v1818 = vsel %vm1688, %v1636, %v1792
  %v1819 = vsel %vm1689, %v1641, %v1793
  %v1820 = vsel %vm1690, %v1644, %v1794
  %v1821 = vsel %vm1691, %v1649, %v1795
  %v1822 = vsel %vm1692, %v1652, %v1796
  %v1823 = vsel %vm1693, %v1657, %v1797
  %v1824 = vsel %vm1694, %v1660, %v1798
  %v1825 = vsel %vm1695, %v1665, %v1799
  %v1826 = vsel %vm1696, %v1668, %v1800
  %v1827 = vld [vmem:[%s5] sm:$0xff]
  %v1828 = vld [vmem:[%s5 + $0x8] sm:$0xff]
  %v1829 = vld [vmem:[%s5 + $0x10] sm:$0xff]
  %v1830 = vld [vmem:[%s5 + $0x18] sm:$0xff]
  %v1831 = vld [vmem:[%s5 + $0x20] sm:$0xff]
  %v1832 = vld [vmem:[%s5 + $0x28] sm:$0xff]
  %v1833 = vld [vmem:[%s5 + $0x30] sm:$0xff]
  %v1834 = vld [vmem:[%s5 + $0x38] sm:$0xff]
  %v1835 = vld [vmem:[%s5 + $0x40] sm:$0xff]
  %v1836 = vld [vmem:[%s5 + $0x48] sm:$0xff]
  %v1837 = vld [vmem:[%s5 + $0x50] sm:$0xff]
  %v1838 = vld [vmem:[%s5 + $0x58] sm:$0xff]
  %v1839 = vld [vmem:[%s5 + $0x60] sm:$0xff]
  %v1840 = vld [vmem:[%s5 + $0x68] sm:$0xff]
  %v1841 = vld [vmem:[%s5 + $0x70] sm:$0xff]
  %v1842 = vld [vmem:[%s5 + $0x78] sm:$0xff]
  %1843 = vmatprep.subr.mxu0 0.0
  %1844 = vmatpush1.msra.mxu0 %v1827
  %1845 = vmatprep.subr.mxu0 0.0
  %1846 = vmatpush1.msra.mxu0 %v1828
  %1847 = vmatprep.subr.mxu0 0.0
  %1848 = vmatpush1.msra.mxu0 %v1829
  %1849 = vmatprep.subr.mxu0 0.0
  %1850 = vmatpush1.msra.mxu0 %v1830
  %1851 = vmatprep.subr.mxu0 0.0
  %1852 = vmatpush1.msra.mxu0 %v1831
  %1853 = vmatprep.subr.mxu0 0.0
  %1854 = vmatpush1.msra.mxu0 %v1832
  %1855 = vmatprep.subr.mxu0 0.0
  %1856 = vmatpush1.msra.mxu0 %v1833
  %1857 = vmatprep.subr.mxu0 0.0
  %1858 = vmatpush1.msra.mxu0 %v1834
  %1859 = vmatprep.subr.mxu0 0.0
  %1860 = vmatpush1.msra.mxu0 %v1835
  %1861 = vmatprep.subr.mxu0 0.0
  %1862 = vmatpush1.msra.mxu0 %v1836
  %1863 = vmatprep.subr.mxu0 0.0
  %1864 = vmatpush1.msra.mxu0 %v1837
  %1865 = vmatprep.subr.mxu0 0.0
  %1866 = vmatpush1.msra.mxu0 %v1838
  %1867 = vmatprep.subr.mxu0 0.0
  %1868 = vmatpush1.msra.mxu0 %v1839
  %1869 = vmatprep.subr.mxu0 0.0
  %1870 = vmatpush1.msra.mxu0 %v1840
  %1871 = vmatprep.subr.mxu0 0.0
  %1872 = vmatpush1.msra.mxu0 %v1841
  %1873 = vmatprep.subr.mxu0 0.0
  %1874 = vmatpush1.msra.mxu0 %v1842
  %1875 = vmatprep.subr.mxu0 0.0
  %1876 = vmatpush1.msra.mxu0 0.0
  %1877 = vmatprep.subr.mxu0 0.0
  %1878 = vmatpush1.msra.mxu0 0.0
  %1879 = vmatprep.subr.mxu0 0.0
  %1880 = vmatpush1.msra.mxu0 0.0
  %1881 = vmatprep.subr.mxu0 0.0
  %1882 = vmatpush1.msra.mxu0 0.0
  %1883 = vmatprep.subr.mxu0 0.0
  %1884 = vmatpush1.msra.mxu0 0.0
  %1885 = vmatprep.subr.mxu0 0.0
  %1886 = vmatpush1.msra.mxu0 0.0
  %1887 = vmatprep.subr.mxu0 0.0
  %1888 = vmatpush1.msra.mxu0 0.0
  %1889 = vmatprep.subr.mxu0 0.0
  %1890 = vmatpush1.msra.mxu0 0.0
  %1891 = vmatprep.subr.mxu0 0.0
  %1892 = vmatpush1.msra.mxu0 0.0
  %1893 = vmatprep.subr.mxu0 0.0
  %1894 = vmatpush1.msra.mxu0 0.0
  %1895 = vmatprep.subr.mxu0 0.0
  %1896 = vmatpush1.msra.mxu0 0.0
  %1897 = vmatprep.subr.mxu0 0.0
  %1898 = vmatpush1.msra.mxu0 0.0
  %1899 = vmatprep.subr.mxu0 0.0
  %1900 = vmatpush1.msra.mxu0 0.0
  %1901 = vmatprep.subr.mxu0 0.0
  %1902 = vmatpush1.msra.mxu0 0.0
  %1903 = vmatprep.subr.mxu0 0.0
  %1904 = vmatpush1.msra.mxu0 0.0
  %1905 = vmatprep.subr.mxu0 0.0
  %1906 = vmatpush1.msra.mxu0 0.0
  %1907 = vmatprep.mubr.f32.mxu0 0.0
  %1908 = vmatmul.mubr.f32.gmra.mrb[0].mxu0 %v1801
  %v1909 = vpop.f32.mrb[0].mxu0
  %v1910 = vadd.f32 0.0, %v1909
  %v1911 = vpop.f32.mrb[0].mxu0
  %1912 = vmatprep.mubr.f32.mxu0 0.0
  %1913 = vmatmul.mubr.f32.gmra.mrb[0].mxu0 %v1802
  %v1914 = vpop.f32.mrb[0].mxu0
  %v1915 = vadd.f32 0.0, %v1914
  %v1916 = vpop.f32.mrb[0].mxu0
  %1917 = vmatprep.mubr.f32.mxu0 0.0
  %1918 = vmatmul.mubr.f32.gmra.mrb[0].mxu0 %v1803
  %v1919 = vpop.f32.mrb[0].mxu0
  %v1920 = vadd.f32 0.0, %v1919
  %v1921 = vpop.f32.mrb[0].mxu0
  %1922 = vmatprep.mubr.f32.mxu0 0.0
  %1923 = vmatmul.mubr.f32.gmra.mrb[0].mxu0 %v1804
  %v1924 = vpop.f32.mrb[0].mxu0
  %v1925 = vadd.f32 0.0, %v1924
  %v1926 = vpop.f32.mrb[0].mxu0
  %1927 = vmatprep.mubr.f32.mxu0 0.0
  %1928 = vmatmul.mubr.f32.gmra.mrb[0].mxu0 %v1805
  %v1929 = vpop.f32.mrb[0].mxu0
  %v1930 = vadd.f32 0.0, %v1929
  %v1931 = vpop.f32.mrb[0].mxu0
  %1932 = vmatprep.mubr.f32.mxu0 0.0
  %1933 = vmatmul.mubr.f32.gmra.mrb[0].mxu0 %v1806
  %v1934 = vpop.f32.mrb[0].mxu0
  %v1935 = vadd.f32 0.0, %v1934
  %v1936 = vpop.f32.mrb[0].mxu0
  %1937 = vmatprep.mubr.f32.mxu0 0.0
  %1938 = vmatmul.mubr.f32.gmra.mrb[0].mxu0 %v1807
  %v1939 = vpop.f32.mrb[0].mxu0
  %v1940 = vadd.f32 0.0, %v1939
  %v1941 = vpop.f32.mrb[0].mxu0
  %1942 = vmatprep.mubr.f32.mxu0 0.0
  %1943 = vmatmul.mubr.f32.gmra.mrb[0].mxu0 %v1808
  %v1944 = vpop.f32.mrb[0].mxu0
  %v1945 = vadd.f32 0.0, %v1944
  %v1946 = vpop.f32.mrb[0].mxu0
  %1947 = vmatprep.mubr.f32.mxu0 0.0
  %1948 = vmatmul.mubr.f32.gmra.mrb[0].mxu0 %v1809
  %v1949 = vpop.f32.mrb[0].mxu0
  %v1950 = vadd.f32 0.0, %v1949
  %v1951 = vpop.f32.mrb[0].mxu0
  %1952 = vmatprep.mubr.f32.mxu0 0.0
  %1953 = vmatmul.mubr.f32.gmra.mrb[0].mxu0 %v1810
  %v1954 = vpop.f32.mrb[0].mxu0
  %v1955 = vadd.f32 0.0, %v1954
  %v1956 = vpop.f32.mrb[0].mxu0
  %1957 = vmatprep.mubr.f32.mxu0 0.0
  %1958 = vmatmul.mubr.f32.gmra.mrb[0].mxu0 %v1811
  %v1959 = vpop.f32.mrb[0].mxu0
  %v1960 = vadd.f32 0.0, %v1959
  %v1961 = vpop.f32.mrb[0].mxu0
  %1962 = vmatprep.mubr.f32.mxu0 0.0
  %1963 = vmatmul.mubr.f32.gmra.mrb[0].mxu0 %v1812
  %v1964 = vpop.f32.mrb[0].mxu0
  %v1965 = vadd.f32 0.0, %v1964
  %v1966 = vpop.f32.mrb[0].mxu0
  %1967 = vmatprep.mubr.f32.mxu0 0.0
  %1968 = vmatmul.mubr.f32.gmra.mrb[0].mxu0 %v1813
  %v1969 = vpop.f32.mrb[0].mxu0
  %v1970 = vadd.f32 0.0, %v1969
  %v1971 = vpop.f32.mrb[0].mxu0
  %1972 = vmatprep.mubr.f32.mxu0 0.0
  %1973 = vmatmul.mubr.f32.gmra.mrb[0].mxu0 %v1814
  %v1974 = vpop.f32.mrb[0].mxu0
  %v1975 = vadd.f32 0.0, %v1974
  %v1976 = vpop.f32.mrb[0].mxu0
  %1977 = vmatprep.mubr.f32.mxu0 0.0
  %1978 = vmatmul.mubr.f32.gmra.mrb[0].mxu0 %v1815
  %v1979 = vpop.f32.mrb[0].mxu0
  %v1980 = vadd.f32 0.0, %v1979
  %v1981 = vpop.f32.mrb[0].mxu0
  %1982 = vmatprep.mubr.f32.mxu0 0.0
  %1983 = vmatmul.mubr.f32.gmra.mrb[0].mxu0 %v1816
  %v1984 = vpop.f32.mrb[0].mxu0
  %v1985 = vadd.f32 0.0, %v1984
  %v1986 = vpop.f32.mrb[0].mxu0
  %1987 = vmatprep.mubr.f32.mxu0 0.0
  %1988 = vmatmul.mubr.f32.gmra.mrb[0].mxu0 %v1817
  %v1989 = vpop.f32.mrb[0].mxu0
  %v1990 = vadd.f32 0.0, %v1989
  %v1991 = vpop.f32.mrb[0].mxu0
  %1992 = vmatprep.mubr.f32.mxu0 0.0
  %1993 = vmatmul.mubr.f32.gmra.mrb[0].mxu0 %v1818
  %v1994 = vpop.f32.mrb[0].mxu0
  %v1995 = vadd.f32 0.0, %v1994
  %v1996 = vpop.f32.mrb[0].mxu0
  %1997 = vmatprep.mubr.f32.mxu0 0.0
  %1998 = vmatmul.mubr.f32.gmra.mrb[0].mxu0 %v1819
  %v1999 = vpop.f32.mrb[0].mxu0
  %v2000 = vadd.f32 0.0, %v1999
  %v2001 = vpop.f32.mrb[0].mxu0
  %2002 = vmatprep.mubr.f32.mxu0 0.0
  %2003 = vmatmul.mubr.f32.gmra.mrb[0].mxu0 %v1820
  %v2004 = vpop.f32.mrb[0].mxu0
  %v2005 = vadd.f32 0.0, %v2004
  %v2006 = vpop.f32.mrb[0].mxu0
  %2007 = vmatprep.mubr.f32.mxu0 0.0
  %2008 = vmatmul.mubr.f32.gmra.mrb[0].mxu0 %v1821
  %v2009 = vpop.f32.mrb[0].mxu0
  %v2010 = vadd.f32 0.0, %v2009
  %v2011 = vpop.f32.mrb[0].mxu0
  %2012 = vmatprep.mubr.f32.mxu0 0.0
  %2013 = vmatmul.mubr.f32.gmra.mrb[0].mxu0 %v1822
  %v2014 = vpop.f32.mrb[0].mxu0
  %v2015 = vadd.f32 0.0, %v2014
  %v2016 = vpop.f32.mrb[0].mxu0
  %2017 = vmatprep.mubr.f32.mxu0 0.0
  %2018 = vmatmul.mubr.f32.gmra.mrb[0].mxu0 %v1823
  %v2019 = vpop.f32.mrb[0].mxu0
  %v2020 = vadd.f32 0.0, %v2019
  %v2021 = vpop.f32.mrb[0].mxu0
  %2022 = vmatprep.mubr.f32.mxu0 0.0
  %2023 = vmatmul.mubr.f32.gmra.mrb[0].mxu0 %v1824
  %v2024 = vpop.f32.mrb[0].mxu0
  %v2025 = vadd.f32 0.0, %v2024
  %v2026 = vpop.f32.mrb[0].mxu0
  %2027 = vmatprep.mubr.f32.mxu0 0.0
  %2028 = vmatmul.mubr.f32.gmra.mrb[0].mxu0 %v1825
  %v2029 = vpop.f32.mrb[0].mxu0
  %v2030 = vadd.f32 0.0, %v2029
  %v2031 = vpop.f32.mrb[0].mxu0
  %2032 = vmatprep.mubr.f32.mxu0 0.0
  %2033 = vmatmul.mubr.f32.gmra.mrb[0].mxu0 %v1826
  %v2034 = vpop.f32.mrb[0].mxu0
  %v2035 = vadd.f32 0.0, %v2034
  %v2036 = vpop.f32.mrb[0].mxu0
  %2037 = vdwg.mxu0
  %v2038 = vlaneseq
  %v2039 = vshrl.u32 %v2038, 7
  %v2040 = vsub.s32 2, %v2039
  %v2041 = vrot.slane %v80, %v2040
  %v2042 = vadd.f32 %v1910, %v2041
  %v2043 = vadd.f32 %v1915, %v2041
  %v2044 = vadd.f32 %v1920, %v2041
  %v2045 = vadd.f32 %v1925, %v2041
  %v2046 = vadd.f32 %v1930, %v2041
  %v2047 = vadd.f32 %v1935, %v2041
  %v2048 = vadd.f32 %v1940, %v2041
  %v2049 = vadd.f32 %v1945, %v2041
  %v2050 = vadd.f32 %v1950, %v2041
  %v2051 = vadd.f32 %v1955, %v2041
  %v2052 = vadd.f32 %v1960, %v2041
  %v2053 = vadd.f32 %v1965, %v2041
  %v2054 = vadd.f32 %v1970, %v2041
  %v2055 = vadd.f32 %v1975, %v2041
  %v2056 = vadd.f32 %v1980, %v2041
  %v2057 = vadd.f32 %v1985, %v2041
  %v2058 = vadd.f32 %v1990, %v2041
  %v2059 = vadd.f32 %v1995, %v2041
  %v2060 = vadd.f32 %v2000, %v2041
  %v2061 = vadd.f32 %v2005, %v2041
  %v2062 = vadd.f32 %v2010, %v2041
  %v2063 = vadd.f32 %v2015, %v2041
  %v2064 = vadd.f32 %v2020, %v2041
  %v2065 = vadd.f32 %v2025, %v2041
  %v2066 = vadd.f32 %v2030, %v2041
  %v2067 = vadd.f32 %v2035, %v2041
  %vm2068 = vcmask 15360
  %2069 = vst.msk [vmem:[%s7] sm:$0xff] %vm2068, %v2042
  %2070 = vst.msk [vmem:[%s7 + $0x8] sm:$0xff] %vm2068, %v2043
  %2071 = vst.msk [vmem:[%s7 + $0x10] sm:$0xff] %vm2068, %v2044
  %2072 = vst.msk [vmem:[%s7 + $0x18] sm:$0xff] %vm2068, %v2045
  %2073 = vst.msk [vmem:[%s7 + $0x20] sm:$0xff] %vm2068, %v2046
  %2074 = vst.msk [vmem:[%s7 + $0x28] sm:$0xff] %vm2068, %v2047
  %2075 = vst.msk [vmem:[%s7 + $0x30] sm:$0xff] %vm2068, %v2048
  %2076 = vst.msk [vmem:[%s7 + $0x38] sm:$0xff] %vm2068, %v2049
  %2077 = vst.msk [vmem:[%s7 + $0x40] sm:$0xff] %vm2068, %v2050
  %2078 = vst.msk [vmem:[%s7 + $0x48] sm:$0xff] %vm2068, %v2051
  %2079 = vst.msk [vmem:[%s7 + $0x50] sm:$0xff] %vm2068, %v2052
  %2080 = vst.msk [vmem:[%s7 + $0x58] sm:$0xff] %vm2068, %v2053
  %2081 = vst.msk [vmem:[%s7 + $0x60] sm:$0xff] %vm2068, %v2054
  %2082 = vst.msk [vmem:[%s7 + $0x68] sm:$0xff] %vm2068, %v2055
  %2083 = vst.msk [vmem:[%s7 + $0x70] sm:$0xff] %vm2068, %v2056
  %2084 = vst.msk [vmem:[%s7 + $0x78] sm:$0xff] %vm2068, %v2057
  %2085 = vst.msk [vmem:[%s7 + $0x80] sm:$0xff] %vm2068, %v2058
  %2086 = vst.msk [vmem:[%s7 + $0x88] sm:$0xff] %vm2068, %v2059
  %2087 = vst.msk [vmem:[%s7 + $0x90] sm:$0xff] %vm2068, %v2060
  %2088 = vst.msk [vmem:[%s7 + $0x98] sm:$0xff] %vm2068, %v2061
  %2089 = vst.msk [vmem:[%s7 + $0xa0] sm:$0xff] %vm2068, %v2062
  %2090 = vst.msk [vmem:[%s7 + $0xa8] sm:$0xff] %vm2068, %v2063
  %2091 = vst.msk [vmem:[%s7 + $0xb0] sm:$0xff] %vm2068, %v2064
  %2092 = vst.msk [vmem:[%s7 + $0xb8] sm:$0xff] %vm2068, %v2065
  %2093 = vst.msk [vmem:[%s7 + $0xc0] sm:$0xff] %vm2068, %v2066
  %2094 = vst.msk [vmem:[%s7 + $0xc8] sm:$0xff] %vm2068, %v2067
  // Predicated region
  $region30: #{cnf_forward.1} parent=0 // pred_check
    _
  $region31: #{cnf_forward.1} parent=0 // pred_check_branch
    %2096 = sbr.rel (0) target = $region33
  $region32: #{cnf_forward.1} parent=0 // pred_region
    _
  $region33: #{cnf_forward.1} parent=0 // pred_fallthru
    _
  // Predicated region
  $region34: #{cnf_forward.1} parent=0 // pred_check
    _
  $region35: #{cnf_forward.1} parent=0 // pred_check_branch
    %2098 = sbr.rel (0) target = $region37
  $region36: #{cnf_forward.1} parent=0 // pred_region
    _
  $region37: #{cnf_forward.1} parent=0 // pred_fallthru
    _

</llo_original>
